<compile_context>
chip_gen: v6e
topology: v6e:2x2x1
jax: 0.10.0
libtpu: 0.0.40
codegen_flags: <defaults>
</compile_context>

<pallas_src>
import numpy as np
import jax
import jax.numpy as jnp
from jax.experimental import pallas as pl
from jax.experimental.pallas import tpu as pltpu

# ----------------------------- cfg constants ------------------------------
FG_THRESH = 0.5
BG_THRESH_HI = 0.5
BG_THRESH_LO = 0.0
FG_FRACTION = 0.25
TRAIN_BATCH_SIZE = 16            # rois_per_image (num_images == 1)
BBOX_NORMALIZE_MEANS = (0.0, 0.0, 0.0, 0.0)
BBOX_NORMALIZE_STDS = (0.1, 0.1, 0.2, 0.2)
BBOX_INSIDE_WEIGHTS = (1.0, 1.0, 1.0, 1.0)
BBOX_NORMALIZE_TARGETS_PRECOMPUTED = True
HAS_ATTRIBUTES = True
HAS_RELATIONS = True

_LANE = 128
_SUBLANE = 8


# ------------- fused Pallas kernel: IoU + argmax + label + targets ----------
def _fused_iou_target_kernel(rois_ref, gt_ref, out_ref):
    """Per-image IoU vs GT with running max/argmax/label + fused bbox targets.

    rois_ref: (B, 4, S8, 128) VMEM, coord-first [x1,y1,x2,y2]; the proposal
              axis is laid out sublane(S8)- and lane(128)-dense.
    gt_ref:   (B*5*K,) SMEM, flattened [b][coord-major x1*K|y1*K|x2*K|y2*K|cls*K].
    out_ref:  (B, 7, S8, 128) VMEM,
              rows = [max_overlap, argmax(float), label, t_dx, t_dy, t_dw, t_dh]
              (targets already normalized by BBOX_NORMALIZE_MEANS/STDS).
    """
    B = rois_ref.shape[0]
    K = gt_ref.shape[0] // (5 * B)

    for b in range(B):                                   # static; B is small
        rx1 = rois_ref[b, 0, :, :]
        ry1 = rois_ref[b, 1, :, :]
        rx2 = rois_ref[b, 2, :, :]
        ry2 = rois_ref[b, 3, :, :]
        rw = rx2 - rx1 + 1.0
        rh = ry2 - ry1 + 1.0
        r_area = rw * rh
        # all-zero (padding) roi: all four coordinates == 0 (matches reference)
        r_zero = (rx1 == 0.0) & (ry1 == 0.0) & (rx2 == 0.0) & (ry2 == 0.0)

        best_ov = jnp.full(rx1.shape, -jnp.inf, dtype=jnp.float32)
        best_idx = jnp.zeros(rx1.shape, dtype=jnp.float32)
        best_lab = jnp.zeros(rx1.shape, dtype=jnp.float32)
        best_gx1 = jnp.zeros(rx1.shape, dtype=jnp.float32)
        best_gy1 = jnp.zeros(rx1.shape, dtype=jnp.float32)
        best_gx2 = jnp.zeros(rx1.shape, dtype=jnp.float32)
        best_gy2 = jnp.zeros(rx1.shape, dtype=jnp.float32)

        base = b * 5 * K
        for k in range(K):                               # static unroll; K small
            gx1 = gt_ref[base + 0 * K + k]
            gy1 = gt_ref[base + 1 * K + k]
            gx2 = gt_ref[base + 2 * K + k]
            gy2 = gt_ref[base + 3 * K + k]
            gcls = gt_ref[base + 4 * K + k]
            gw = gx2 - gx1 + 1.0
            gh = gy2 - gy1 + 1.0
            g_area = gw * gh
            # all-zero gt box -> overlaps forced to 0 for this k
            g_zero = (gx1 == 0.0) & (gy1 == 0.0) & (gx2 == 0.0) & (gy2 == 0.0)
            gzf = jnp.where(g_zero, 0.0, 1.0)

            iw = jnp.maximum(jnp.minimum(rx2, gx2) - jnp.maximum(rx1, gx1) + 1.0, 0.0)
            ih = jnp.maximum(jnp.minimum(ry2, gy2) - jnp.maximum(ry1, gy1) + 1.0, 0.0)
            inter = iw * ih
            ua = r_area + g_area - inter
            ov = (inter / jnp.maximum(ua, 1e-8)) * gzf   # guard degenerate union

            better = ov > best_ov                        # strict '>' => first index on ties
            best_ov = jnp.where(better, ov, best_ov)
            best_idx = jnp.where(better, jnp.float32(k), best_idx)
            best_lab = jnp.where(better, gcls, best_lab)
            best_gx1 = jnp.where(better, gx1, best_gx1)
            best_gy1 = jnp.where(better, gy1, best_gy1)
            best_gx2 = jnp.where(better, gx2, best_gx2)
            best_gy2 = jnp.where(better, gy2, best_gy2)

        # padding-roi mask applied once (hoisted out of the K loop)
        best_ov = jnp.where(r_zero, -1.0, best_ov)

        # bbox_transform_batch2 against the argmax gt (exactly what the
        # reference computes for the sampled rois; host just gathers keep_inds)
        ex_w = jnp.maximum(rw, 1e-6)
        ex_h = jnp.maximum(rh, 1e-6)
        ex_cx = rx1 + 0.5 * rw
        ex_cy = ry1 + 0.5 * rh
        gt_w_raw = best_gx2 - best_gx1 + 1.0
        gt_h_raw = best_gy2 - best_gy1 + 1.0
        gt_cx = best_gx1 + 0.5 * gt_w_raw
        gt_cy = best_gy1 + 0.5 * gt_h_raw
        gt_w = jnp.maximum(gt_w_raw, 1e-6)
        gt_h = jnp.maximum(gt_h_raw, 1e-6)

        raw = ((gt_cx - ex_cx) / ex_w,
               (gt_cy - ex_cy) / ex_h,
               jnp.log(gt_w / ex_w),
               jnp.log(gt_h / ex_h))

        # direct row stores (lane- and sublane-dense, no concat temporary)
        out_ref[b, 0, :, :] = best_ov
        out_ref[b, 1, :, :] = best_idx
        out_ref[b, 2, :, :] = best_lab
        for c in range(4):
            t_c = raw[c]
            if BBOX_NORMALIZE_TARGETS_PRECOMPUTED:
                if BBOX_NORMALIZE_MEANS[c] != 0.0:       # compile-time skip for 0 means
                    t_c = t_c - BBOX_NORMALIZE_MEANS[c]
                t_c = t_c * (1.0 / BBOX_NORMALIZE_STDS[c])
            out_ref[b, 3 + c, :, :] = t_c


def fused_iou_argmax_targets(all_rois_cat_np, gt_boxes_np):
    """all_rois_cat_np: (B, Nall, 5) numpy; gt_boxes_np: (B, K, >=5) numpy.

    Single pallas_call / single D2H copy.  Returns numpy:
      max_overlaps (B,Nall) f32, gt_assignment (B,Nall) i64,
      labels_all (B,Nall) f32 (assigned gt class),
      targets_all (B,Nall,4) f32 (normalized regression targets vs assigned gt).
    """
    B, Nall, _ = all_rois_cat_np.shape
    K = gt_boxes_np.shape[1]

    # sublane-dense proposal layout: (S8, 128) slab per coordinate
    S = max(1, -(-Nall // _LANE))
    S8 = ((S + _SUBLANE - 1) // _SUBLANE) * _SUBLANE
    Np = S8 * _LANE

    rois_flat = np.zeros((B, 4, Np), dtype=np.float32)
    rois_flat[:, :, :Nall] = all_rois_cat_np[:, :, 1:5].transpose(0, 2, 1)
    rois_t = rois_flat.reshape(B, 4, S8, _LANE)

    gt_flat = np.ascontiguousarray(
        gt_boxes_np[:, :, :5].transpose(0, 2, 1)).reshape(B * 5 * K).astype(np.float32)

    out = pl.pallas_call(
        _fused_iou_target_kernel,
        out_shape=jax.ShapeDtypeStruct((B, 7, S8, _LANE), jnp.float32),
        in_specs=[
            pl.BlockSpec(memory_space=pltpu.MemorySpace.VMEM),
            pl.BlockSpec(memory_space=pltpu.MemorySpace.SMEM),
        ],
        out_specs=pl.BlockSpec(memory_space=pltpu.MemorySpace.VMEM),
    )(rois_t, gt_flat)

    out_np = np.asarray(out).reshape(B, 7, Np)[:, :, :Nall]   # one D2H copy
    max_ov = out_np[:, 0, :]
    gt_assign = np.rint(out_np[:, 1, :]).astype(np.int64)
    labels_all = out_np[:, 2, :]
    targets_all = np.ascontiguousarray(out_np[:, 3:7, :].transpose(0, 2, 1))
    return max_ov, gt_assign, labels_all, targets_all


# ---------------- host-side sampling (mirrors the torch code) --------------
# TODO(synk): the random fg/bg RoI and relation-pair sampling is data-dependent
# dynamic-shape control flow (nonzero / permutation / npr.choice); it is
# mirrored 1:1 on host with a seeded numpy RNG rather than inside a Pallas
# kernel.
def _sample_rois_host(all_rois, gt_boxes, labels_all, max_overlaps, gt_assignment,
                      fg_rois_per_image, rois_per_image, num_att_classes, rng):
    B = all_rois.shape[0]

    labels_batch = np.zeros((B, rois_per_image), dtype=np.float32)
    labels_att_batch = np.zeros((B, rois_per_image, num_att_classes), dtype=np.float32)
    labels_rel_batch = np.zeros((B, rois_per_image, 1), dtype=np.float32)
    roi_pairs_batch = np.zeros((B, rois_per_image, 9), dtype=np.float32)
    roi_pairs_proposal = np.zeros((B, rois_per_image, 2), dtype=np.float32)
    rois_batch = np.zeros((B, rois_per_image, 5), dtype=np.float32)
    keep_inds_batch = np.zeros((B, rois_per_image), dtype=np.int64)

    for i in range(B):
        mo = max_overlaps[i]
        fg_inds = np.nonzero(mo >= FG_THRESH)[0]
        bg_inds = np.nonzero((mo < BG_THRESH_HI) & (mo >= BG_THRESH_LO))[0]
        fg_num, bg_num = fg_inds.size, bg_inds.size

        if fg_num > 0 and bg_num > 0:
            fg_this = min(fg_rois_per_image, fg_num)
            perm = rng.permutation(fg_num)
            fg_inds = fg_inds[perm[:fg_this]]
            bg_this = rois_per_image - fg_this
            rnd = np.floor(rng.rand(bg_this) * bg_num).astype(np.int64)
            bg_inds = bg_inds[rnd]
        elif fg_num > 0 and bg_num == 0:
            rnd = np.floor(rng.rand(rois_per_image) * fg_num).astype(np.int64)
            fg_inds = fg_inds[rnd]
            fg_this = rois_per_image
            bg_inds = np.zeros((0,), dtype=np.int64)
        elif bg_num > 0 and fg_num == 0:
            rnd = np.floor(rng.rand(rois_per_image) * bg_num).astype(np.int64)
            bg_inds = bg_inds[rnd]
            fg_this = 0
            fg_inds = np.zeros((0,), dtype=np.int64)
        else:
            raise RuntimeError("bg_num_rois = 0 and fg_num_rois = 0, this should not happen!")

        keep_inds = np.concatenate([fg_inds, bg_inds]).astype(np.int64)
        keep_inds_batch[i] = keep_inds
        labels_batch[i] = labels_all[i][keep_inds]
        if fg_this < rois_per_image:
            labels_batch[i, fg_this:] = 0

        if HAS_ATTRIBUTES and fg_inds.size > 0:
            # vectorized equivalent of the reference double python loop
            att = gt_boxes[i][gt_assignment[i][fg_inds]][:, 5:21].astype(np.int64)
            rows = np.arange(att.shape[0])
            labels_att_batch[i, rows[att[:, 0] == 0], 0] = 1.0
            jj, kk = np.nonzero(att > 0)
            labels_att_batch[i, jj, att[jj, kk]] = 1.0

        if HAS_RELATIONS:
            rel_per_image = rois_per_image
            if fg_inds.size > 0:
                gt_rel = gt_boxes[i][:, 21:]
                id_i, id_j = np.meshgrid(np.arange(fg_inds.size), np.arange(fg_inds.size),
                                         indexing='ij')
                id_i = id_i.reshape(-1)
                id_j = id_j.reshape(-1)
                pair_labels = gt_rel[gt_assignment[i][fg_inds[id_i]],
                                     gt_assignment[i][fg_inds[id_j]]]
                if pair_labels.sum() > 0:
                    fg_id_rel = np.nonzero(pair_labels)[0]
                    rel_fg_num = int(min(np.round(rel_per_image * FG_FRACTION), fg_id_rel.size))
                else:
                    rel_fg_num = 0
                if rel_fg_num > 0:
                    fg_id_rel = rng.choice(fg_id_rel, size=rel_fg_num, replace=False)
                    rel_labels_fg = pair_labels[fg_id_rel]
                    sub_assignment_fg = id_i[fg_id_rel]
                    obj_assignment_fg = id_j[fg_id_rel]
                    sub_list_fg = fg_inds[sub_assignment_fg]
                    obj_list_fg = fg_inds[obj_assignment_fg]
                    labels_rel_batch[i, :rel_fg_num, 0] = rel_labels_fg
                    rel_bg_num = rel_per_image - rel_fg_num
                    sub_assignment_bg = rng.choice(np.arange(keep_inds.size), size=rel_bg_num,
                                                   replace=True)
                    obj_assignment_bg = rng.choice(np.arange(keep_inds.size), size=rel_bg_num,
                                                   replace=True)
                    sub_list_bg = keep_inds[sub_assignment_bg]
                    obj_list_bg = keep_inds[obj_assignment_bg]
                    sub_assignment = np.concatenate([sub_assignment_fg, sub_assignment_bg])
                    obj_assignment = np.concatenate([obj_assignment_fg, obj_assignment_bg])
                    sub_list = np.concatenate([sub_list_fg, sub_list_bg])
                    obj_list = np.concatenate([obj_list_fg, obj_list_bg])
                else:
                    rel_bg_num = rel_per_image
                    sub_assignment = rng.choice(np.arange(keep_inds.size), size=rel_bg_num,
                                                replace=True)
                    obj_assignment = rng.choice(np.arange(keep_inds.size), size=rel_bg_num,
                                                replace=True)
                    sub_list = keep_inds[sub_assignment]
                    obj_list = keep_inds[obj_assignment]
                roi_pairs = np.zeros((rel_per_image, 9), dtype=np.float32)
                roi_pairs[:, 1:5] = all_rois[i][sub_list][:, 1:5]
                roi_pairs[:, 5:9] = all_rois[i][obj_list][:, 1:5]
                roi_pairs[:, 0] = i
                roi_pairs_batch[i] = roi_pairs
                roi_pairs_proposal[i] = (np.stack([sub_assignment, obj_assignment], 1)
                                         + i * rois_per_image)

        rois_batch[i] = all_rois[i][keep_inds]
        rois_batch[i, :, 0] = i

    return (labels_batch, labels_att_batch, labels_rel_batch, rois_batch,
            roi_pairs_batch, roi_pairs_proposal, keep_inds_batch)


# ------------------------------ forward pass -------------------------------
def proposal_target_layer_msdn_forward(all_rois, gt_boxes, num_att_classes, seed=0):
    all_rois_np = np.asarray(all_rois, dtype=np.float32)      # (B, N, 5)
    gt_boxes_np = np.asarray(gt_boxes, dtype=np.float32)      # (B, K, 21+K)
    B, N, _ = all_rois_np.shape
    K = gt_boxes_np.shape[1]

    # append gt boxes as additional RoIs: [batch_idx, x1, y1, x2, y2]
    gt_append = np.zeros((B, K, 5), dtype=np.float32)
    gt_append[:, :, 1:5] = gt_boxes_np[:, :, :4]
    gt_append[:, :, 0] = np.arange(B, dtype=np.float32)[:, None]
    all_rois_cat = np.concatenate([all_rois_np, gt_append], axis=1)   # (B, N+K, 5)

    num_images = 1
    rois_per_image = int(TRAIN_BATCH_SIZE / num_images)
    fg_rois_per_image = int(np.round(FG_FRACTION * rois_per_image))

    # Fused Pallas kernel: IoU + max/argmax + label gather + normalized targets
    max_ov, gt_assign, labels_all, targets_all = fused_iou_argmax_targets(
        all_rois_cat, gt_boxes_np)

    # Host-side fg/bg + relation-pair sampling (seeded, mirrors torch code)
    rng = np.random.RandomState(seed)
    (labels_batch, labels_att_batch, labels_rel_batch, rois_batch,
     roi_pairs_batch, roi_pairs_proposal, keep_inds_batch) = _sample_rois_host(
        all_rois_cat, gt_boxes_np, labels_all, max_ov, gt_assign,
        fg_rois_per_image, rois_per_image, num_att_classes, rng)

    # Gather fused normalized targets at the sampled RoIs; gate by final label
    # (matches _get_bbox_regression_labels_pytorch) and build weights.
    bbox_targets = np.zeros((B, rois_per_image, 4), dtype=np.float32)
    for i in range(B):
        bbox_targets[i] = targets_all[i][keep_inds_batch[i]]
    pos = (labels_batch > 0).astype(np.float32)[:, :, None]
    bbox_targets = bbox_targets * pos
    bbox_inside_weights = pos * np.asarray(BBOX_INSIDE_WEIGHTS, dtype=np.float32)
    bbox_outside_weights = (bbox_inside_weights > 0).astype(np.float32)

    return (jnp.asarray(rois_batch), jnp.asarray(roi_pairs_batch),
            jnp.asarray(roi_pairs_proposal), jnp.asarray(labels_batch),
            jnp.asarray(labels_att_batch), jnp.asarray(labels_rel_batch),
            jnp.asarray(bbox_targets), jnp.asarray(bbox_inside_weights),
            jnp.asarray(bbox_outside_weights))


# ----------------------------------- main -----------------------------------
if __name__ == "__main__":
    B, N, K = 2, 64, 8
    nclasses_obj, nclasses_att, nclasses_rel = 8, 17, 4

    key = jax.random.PRNGKey(0)
    k1, k2, k3, k4, k5, k6, k7 = jax.random.split(key, 7)

    roi_xy = jax.random.uniform(k1, (B, N, 2), minval=0.0, maxval=80.0)
    roi_wh = jax.random.uniform(k2, (B, N, 2), minval=5.0, maxval=47.0)
    roi_box = jnp.concatenate([roi_xy, roi_xy + roi_wh], axis=2)
    bidx = jnp.broadcast_to(jnp.arange(B, dtype=jnp.float32)[:, None, None], (B, N, 1))
    all_rois = jnp.concatenate([bidx, roi_box], axis=2)                       # (B, N, 5)

    gt_xy = jax.random.uniform(k3, (B, K, 2), minval=0.0, maxval=60.0)
    gt_wh = jax.random.uniform(k4, (B, K, 2), minval=10.0, maxval=50.0)
    gt_box = jnp.concatenate([gt_xy, gt_xy + gt_wh], axis=2)
    gt_cls = jax.random.randint(k5, (B, K, 1), 1, nclasses_obj).astype(jnp.float32)
    gt_att = jax.random.randint(k6, (B, K, 16), 0, nclasses_att).astype(jnp.float32)
    gt_rel = jax.random.randint(k7, (B, K, K), 0, nclasses_rel).astype(jnp.float32)
    gt_boxes = jnp.concatenate([gt_box, gt_cls, gt_att, gt_rel], axis=2)      # (B, K, 21+K)

    outs = proposal_target_layer_msdn_forward(all_rois, gt_boxes, nclasses_att, seed=0)
    for o in outs:
        jax.block_until_ready(o)

    (rois, roi_pairs, roi_pairs_proposal, labels, labels_att, labels_rel,
     bbox_targets, bbox_inside_weights, bbox_outside_weights) = outs
    assert rois.shape == (B, TRAIN_BATCH_SIZE, 5)
    assert roi_pairs.shape == (B, TRAIN_BATCH_SIZE, 9)
    assert roi_pairs_proposal.shape == (B, TRAIN_BATCH_SIZE, 2)
    assert labels.shape == (B, TRAIN_BATCH_SIZE)
    assert labels_att.shape == (B, TRAIN_BATCH_SIZE, nclasses_att)
    assert labels_rel.shape == (B, TRAIN_BATCH_SIZE, 1)
    assert bbox_targets.shape == (B, TRAIN_BATCH_SIZE, 4)
    assert bbox_inside_weights.shape == (B, TRAIN_BATCH_SIZE, 4)
    assert bbox_outside_weights.shape == (B, TRAIN_BATCH_SIZE, 4)
    assert bool(jnp.all(jnp.isfinite(bbox_targets)))

    print("KERNEL_OK")
</pallas_src>

<mosaic_0001>
module attributes {stable_mosaic.version = 11 : i64} {
  func.func @_fused_iou_target_kernel(%arg0: memref<2x4x8x128xf32, #tpu.memory_space<vmem>>, %arg1: memref<80xf32, #tpu.memory_space<smem>>, %arg2: memref<2x7x8x128xf32, #tpu.memory_space<vmem>>) attributes {dimension_semantics = [], scalar_prefetch = 0 : i64, scratch_operands = 0 : i64, tpu.core_type = #tpu.core_type<tc>} {
    %c0 = arith.constant 0 : index
    %c0_0 = arith.constant 0 : index
    %c0_1 = arith.constant 0 : index
    %c0_2 = arith.constant 0 : index
    %0 = vector.load %arg0[%c0, %c0_0, %c0_1, %c0_2] : memref<2x4x8x128xf32, #tpu.memory_space<vmem>>, vector<1x1x8x128xf32>
    %1 = vector.shape_cast %0 : vector<1x1x8x128xf32> to vector<8x128xf32>
    %c0_3 = arith.constant 0 : index
    %c1 = arith.constant 1 : index
    %c0_4 = arith.constant 0 : index
    %c0_5 = arith.constant 0 : index
    %2 = vector.load %arg0[%c0_3, %c1, %c0_4, %c0_5] : memref<2x4x8x128xf32, #tpu.memory_space<vmem>>, vector<1x1x8x128xf32>
    %3 = vector.shape_cast %2 : vector<1x1x8x128xf32> to vector<8x128xf32>
    %c0_6 = arith.constant 0 : index
    %c2 = arith.constant 2 : index
    %c0_7 = arith.constant 0 : index
    %c0_8 = arith.constant 0 : index
    %4 = vector.load %arg0[%c0_6, %c2, %c0_7, %c0_8] : memref<2x4x8x128xf32, #tpu.memory_space<vmem>>, vector<1x1x8x128xf32>
    %5 = vector.shape_cast %4 : vector<1x1x8x128xf32> to vector<8x128xf32>
    %c0_9 = arith.constant 0 : index
    %c3 = arith.constant 3 : index
    %c0_10 = arith.constant 0 : index
    %c0_11 = arith.constant 0 : index
    %6 = vector.load %arg0[%c0_9, %c3, %c0_10, %c0_11] : memref<2x4x8x128xf32, #tpu.memory_space<vmem>>, vector<1x1x8x128xf32>
    %7 = vector.shape_cast %6 : vector<1x1x8x128xf32> to vector<8x128xf32>
    %8 = arith.subf %5, %1 : vector<8x128xf32>
    %cst = arith.constant 1.000000e+00 : f32
    %9 = vector.broadcast %cst : f32 to vector<8x128xf32>
    %10 = arith.addf %8, %9 : vector<8x128xf32>
    %11 = arith.subf %7, %3 : vector<8x128xf32>
    %cst_12 = arith.constant 1.000000e+00 : f32
    %12 = vector.broadcast %cst_12 : f32 to vector<8x128xf32>
    %13 = arith.addf %11, %12 : vector<8x128xf32>
    %14 = arith.mulf %10, %13 : vector<8x128xf32>
    %cst_13 = arith.constant 0.000000e+00 : f32
    %15 = vector.broadcast %cst_13 : f32 to vector<8x128xf32>
    %16 = arith.cmpf oeq, %1, %15 : vector<8x128xf32>
    %cst_14 = arith.constant 0.000000e+00 : f32
    %17 = vector.broadcast %cst_14 : f32 to vector<8x128xf32>
    %18 = arith.cmpf oeq, %3, %17 : vector<8x128xf32>
    %19 = arith.andi %16, %18 : vector<8x128xi1>
    %cst_15 = arith.constant 0.000000e+00 : f32
    %20 = vector.broadcast %cst_15 : f32 to vector<8x128xf32>
    %21 = arith.cmpf oeq, %5, %20 : vector<8x128xf32>
    %22 = arith.andi %19, %21 : vector<8x128xi1>
    %cst_16 = arith.constant 0.000000e+00 : f32
    %23 = vector.broadcast %cst_16 : f32 to vector<8x128xf32>
    %24 = arith.cmpf oeq, %7, %23 : vector<8x128xf32>
    %25 = arith.andi %22, %24 : vector<8x128xi1>
    %cst_17 = arith.constant 0xFF800000 : f32
    %26 = vector.broadcast %cst_17 : f32 to vector<8x128xf32>
    %cst_18 = arith.constant 0.000000e+00 : f32
    %27 = vector.broadcast %cst_18 : f32 to vector<8x128xf32>
    %cst_19 = arith.constant 0.000000e+00 : f32
    %28 = vector.broadcast %cst_19 : f32 to vector<8x128xf32>
    %cst_20 = arith.constant 0.000000e+00 : f32
    %29 = vector.broadcast %cst_20 : f32 to vector<8x128xf32>
    %cst_21 = arith.constant 0.000000e+00 : f32
    %30 = vector.broadcast %cst_21 : f32 to vector<8x128xf32>
    %cst_22 = arith.constant 0.000000e+00 : f32
    %31 = vector.broadcast %cst_22 : f32 to vector<8x128xf32>
    %cst_23 = arith.constant 0.000000e+00 : f32
    %32 = vector.broadcast %cst_23 : f32 to vector<8x128xf32>
    %c0_24 = arith.constant 0 : index
    %33 = memref.load %arg1[%c0_24] : memref<80xf32, #tpu.memory_space<smem>>
    %c8 = arith.constant 8 : index
    %34 = memref.load %arg1[%c8] : memref<80xf32, #tpu.memory_space<smem>>
    %c16 = arith.constant 16 : index
    %35 = memref.load %arg1[%c16] : memref<80xf32, #tpu.memory_space<smem>>
    %c24 = arith.constant 24 : index
    %36 = memref.load %arg1[%c24] : memref<80xf32, #tpu.memory_space<smem>>
    %c32 = arith.constant 32 : index
    %37 = memref.load %arg1[%c32] : memref<80xf32, #tpu.memory_space<smem>>
    %38 = arith.subf %35, %33 : f32
    %cst_25 = arith.constant 1.000000e+00 : f32
    %39 = arith.addf %38, %cst_25 : f32
    %40 = arith.subf %36, %34 : f32
    %cst_26 = arith.constant 1.000000e+00 : f32
    %41 = arith.addf %40, %cst_26 : f32
    %42 = arith.mulf %39, %41 : f32
    %cst_27 = arith.constant 0.000000e+00 : f32
    %43 = arith.cmpf oeq, %33, %cst_27 : f32
    %cst_28 = arith.constant 0.000000e+00 : f32
    %44 = arith.cmpf oeq, %34, %cst_28 : f32
    %45 = arith.andi %43, %44 : i1
    %cst_29 = arith.constant 0.000000e+00 : f32
    %46 = arith.cmpf oeq, %35, %cst_29 : f32
    %47 = arith.andi %45, %46 : i1
    %cst_30 = arith.constant 0.000000e+00 : f32
    %48 = arith.cmpf oeq, %36, %cst_30 : f32
    %49 = arith.andi %47, %48 : i1
    %cst_31 = arith.constant 0.000000e+00 : f32
    %cst_32 = arith.constant 1.000000e+00 : f32
    %50 = arith.select %49, %cst_31, %cst_32 : f32
    %51 = vector.broadcast %35 : f32 to vector<8x128xf32>
    %52 = arith.minimumf %5, %51 : vector<8x128xf32>
    %53 = vector.broadcast %33 : f32 to vector<8x128xf32>
    %54 = arith.maximumf %1, %53 : vector<8x128xf32>
    %55 = arith.subf %52, %54 : vector<8x128xf32>
    %cst_33 = arith.constant 1.000000e+00 : f32
    %56 = vector.broadcast %cst_33 : f32 to vector<8x128xf32>
    %57 = arith.addf %55, %56 : vector<8x128xf32>
    %cst_34 = arith.constant 0.000000e+00 : f32
    %58 = vector.broadcast %cst_34 : f32 to vector<8x128xf32>
    %59 = arith.maximumf %57, %58 : vector<8x128xf32>
    %60 = vector.broadcast %36 : f32 to vector<8x128xf32>
    %61 = arith.minimumf %7, %60 : vector<8x128xf32>
    %62 = vector.broadcast %34 : f32 to vector<8x128xf32>
    %63 = arith.maximumf %3, %62 : vector<8x128xf32>
    %64 = arith.subf %61, %63 : vector<8x128xf32>
    %cst_35 = arith.constant 1.000000e+00 : f32
    %65 = vector.broadcast %cst_35 : f32 to vector<8x128xf32>
    %66 = arith.addf %64, %65 : vector<8x128xf32>
    %cst_36 = arith.constant 0.000000e+00 : f32
    %67 = vector.broadcast %cst_36 : f32 to vector<8x128xf32>
    %68 = arith.maximumf %66, %67 : vector<8x128xf32>
    %69 = arith.mulf %59, %68 : vector<8x128xf32>
    %70 = vector.broadcast %42 : f32 to vector<8x128xf32>
    %71 = arith.addf %14, %70 : vector<8x128xf32>
    %72 = arith.subf %71, %69 : vector<8x128xf32>
    %cst_37 = arith.constant 9.99999993E-9 : f32
    %73 = vector.broadcast %cst_37 : f32 to vector<8x128xf32>
    %74 = arith.maximumf %72, %73 : vector<8x128xf32>
    %75 = arith.divf %69, %74 : vector<8x128xf32>
    %76 = vector.broadcast %50 : f32 to vector<8x128xf32>
    %77 = arith.mulf %75, %76 : vector<8x128xf32>
    %78 = arith.cmpf ogt, %77, %26 : vector<8x128xf32>
    %79 = arith.select %78, %77, %26 : vector<8x128xi1>, vector<8x128xf32>
    %cst_38 = arith.constant 0.000000e+00 : f32
    %80 = vector.broadcast %cst_38 : f32 to vector<8x128xf32>
    %81 = arith.select %78, %80, %27 : vector<8x128xi1>, vector<8x128xf32>
    %82 = vector.broadcast %37 : f32 to vector<8x128xf32>
    %83 = arith.select %78, %82, %28 : vector<8x128xi1>, vector<8x128xf32>
    %84 = vector.broadcast %33 : f32 to vector<8x128xf32>
    %85 = arith.select %78, %84, %29 : vector<8x128xi1>, vector<8x128xf32>
    %86 = vector.broadcast %34 : f32 to vector<8x128xf32>
    %87 = arith.select %78, %86, %30 : vector<8x128xi1>, vector<8x128xf32>
    %88 = vector.broadcast %35 : f32 to vector<8x128xf32>
    %89 = arith.select %78, %88, %31 : vector<8x128xi1>, vector<8x128xf32>
    %90 = vector.broadcast %36 : f32 to vector<8x128xf32>
    %91 = arith.select %78, %90, %32 : vector<8x128xi1>, vector<8x128xf32>
    %c1_39 = arith.constant 1 : index
    %92 = memref.load %arg1[%c1_39] : memref<80xf32, #tpu.memory_space<smem>>
    %c9 = arith.constant 9 : index
    %93 = memref.load %arg1[%c9] : memref<80xf32, #tpu.memory_space<smem>>
    %c17 = arith.constant 17 : index
    %94 = memref.load %arg1[%c17] : memref<80xf32, #tpu.memory_space<smem>>
    %c25 = arith.constant 25 : index
    %95 = memref.load %arg1[%c25] : memref<80xf32, #tpu.memory_space<smem>>
    %c33 = arith.constant 33 : index
    %96 = memref.load %arg1[%c33] : memref<80xf32, #tpu.memory_space<smem>>
    %97 = arith.subf %94, %92 : f32
    %cst_40 = arith.constant 1.000000e+00 : f32
    %98 = arith.addf %97, %cst_40 : f32
    %99 = arith.subf %95, %93 : f32
    %cst_41 = arith.constant 1.000000e+00 : f32
    %100 = arith.addf %99, %cst_41 : f32
    %101 = arith.mulf %98, %100 : f32
    %cst_42 = arith.constant 0.000000e+00 : f32
    %102 = arith.cmpf oeq, %92, %cst_42 : f32
    %cst_43 = arith.constant 0.000000e+00 : f32
    %103 = arith.cmpf oeq, %93, %cst_43 : f32
    %104 = arith.andi %102, %103 : i1
    %cst_44 = arith.constant 0.000000e+00 : f32
    %105 = arith.cmpf oeq, %94, %cst_44 : f32
    %106 = arith.andi %104, %105 : i1
    %cst_45 = arith.constant 0.000000e+00 : f32
    %107 = arith.cmpf oeq, %95, %cst_45 : f32
    %108 = arith.andi %106, %107 : i1
    %cst_46 = arith.constant 0.000000e+00 : f32
    %cst_47 = arith.constant 1.000000e+00 : f32
    %109 = arith.select %108, %cst_46, %cst_47 : f32
    %110 = vector.broadcast %94 : f32 to vector<8x128xf32>
    %111 = arith.minimumf %5, %110 : vector<8x128xf32>
    %112 = vector.broadcast %92 : f32 to vector<8x128xf32>
    %113 = arith.maximumf %1, %112 : vector<8x128xf32>
    %114 = arith.subf %111, %113 : vector<8x128xf32>
    %cst_48 = arith.constant 1.000000e+00 : f32
    %115 = vector.broadcast %cst_48 : f32 to vector<8x128xf32>
    %116 = arith.addf %114, %115 : vector<8x128xf32>
    %cst_49 = arith.constant 0.000000e+00 : f32
    %117 = vector.broadcast %cst_49 : f32 to vector<8x128xf32>
    %118 = arith.maximumf %116, %117 : vector<8x128xf32>
    %119 = vector.broadcast %95 : f32 to vector<8x128xf32>
    %120 = arith.minimumf %7, %119 : vector<8x128xf32>
    %121 = vector.broadcast %93 : f32 to vector<8x128xf32>
    %122 = arith.maximumf %3, %121 : vector<8x128xf32>
    %123 = arith.subf %120, %122 : vector<8x128xf32>
    %cst_50 = arith.constant 1.000000e+00 : f32
    %124 = vector.broadcast %cst_50 : f32 to vector<8x128xf32>
    %125 = arith.addf %123, %124 : vector<8x128xf32>
    %cst_51 = arith.constant 0.000000e+00 : f32
    %126 = vector.broadcast %cst_51 : f32 to vector<8x128xf32>
    %127 = arith.maximumf %125, %126 : vector<8x128xf32>
    %128 = arith.mulf %118, %127 : vector<8x128xf32>
    %129 = vector.broadcast %101 : f32 to vector<8x128xf32>
    %130 = arith.addf %14, %129 : vector<8x128xf32>
    %131 = arith.subf %130, %128 : vector<8x128xf32>
    %cst_52 = arith.constant 9.99999993E-9 : f32
    %132 = vector.broadcast %cst_52 : f32 to vector<8x128xf32>
    %133 = arith.maximumf %131, %132 : vector<8x128xf32>
    %134 = arith.divf %128, %133 : vector<8x128xf32>
    %135 = vector.broadcast %109 : f32 to vector<8x128xf32>
    %136 = arith.mulf %134, %135 : vector<8x128xf32>
    %137 = arith.cmpf ogt, %136, %79 : vector<8x128xf32>
    %138 = arith.select %137, %136, %79 : vector<8x128xi1>, vector<8x128xf32>
    %cst_53 = arith.constant 1.000000e+00 : f32
    %139 = vector.broadcast %cst_53 : f32 to vector<8x128xf32>
    %140 = arith.select %137, %139, %81 : vector<8x128xi1>, vector<8x128xf32>
    %141 = vector.broadcast %96 : f32 to vector<8x128xf32>
    %142 = arith.select %137, %141, %83 : vector<8x128xi1>, vector<8x128xf32>
    %143 = vector.broadcast %92 : f32 to vector<8x128xf32>
    %144 = arith.select %137, %143, %85 : vector<8x128xi1>, vector<8x128xf32>
    %145 = vector.broadcast %93 : f32 to vector<8x128xf32>
    %146 = arith.select %137, %145, %87 : vector<8x128xi1>, vector<8x128xf32>
    %147 = vector.broadcast %94 : f32 to vector<8x128xf32>
    %148 = arith.select %137, %147, %89 : vector<8x128xi1>, vector<8x128xf32>
    %149 = vector.broadcast %95 : f32 to vector<8x128xf32>
    %150 = arith.select %137, %149, %91 : vector<8x128xi1>, vector<8x128xf32>
    %c2_54 = arith.constant 2 : index
    %151 = memref.load %arg1[%c2_54] : memref<80xf32, #tpu.memory_space<smem>>
    %c10 = arith.constant 10 : index
    %152 = memref.load %arg1[%c10] : memref<80xf32, #tpu.memory_space<smem>>
    %c18 = arith.constant 18 : index
    %153 = memref.load %arg1[%c18] : memref<80xf32, #tpu.memory_space<smem>>
    %c26 = arith.constant 26 : index
    %154 = memref.load %arg1[%c26] : memref<80xf32, #tpu.memory_space<smem>>
    %c34 = arith.constant 34 : index
    %155 = memref.load %arg1[%c34] : memref<80xf32, #tpu.memory_space<smem>>
    %156 = arith.subf %153, %151 : f32
    %cst_55 = arith.constant 1.000000e+00 : f32
    %157 = arith.addf %156, %cst_55 : f32
    %158 = arith.subf %154, %152 : f32
    %cst_56 = arith.constant 1.000000e+00 : f32
    %159 = arith.addf %158, %cst_56 : f32
    %160 = arith.mulf %157, %159 : f32
    %cst_57 = arith.constant 0.000000e+00 : f32
    %161 = arith.cmpf oeq, %151, %cst_57 : f32
    %cst_58 = arith.constant 0.000000e+00 : f32
    %162 = arith.cmpf oeq, %152, %cst_58 : f32
    %163 = arith.andi %161, %162 : i1
    %cst_59 = arith.constant 0.000000e+00 : f32
    %164 = arith.cmpf oeq, %153, %cst_59 : f32
    %165 = arith.andi %163, %164 : i1
    %cst_60 = arith.constant 0.000000e+00 : f32
    %166 = arith.cmpf oeq, %154, %cst_60 : f32
    %167 = arith.andi %165, %166 : i1
    %cst_61 = arith.constant 0.000000e+00 : f32
    %cst_62 = arith.constant 1.000000e+00 : f32
    %168 = arith.select %167, %cst_61, %cst_62 : f32
    %169 = vector.broadcast %153 : f32 to vector<8x128xf32>
    %170 = arith.minimumf %5, %169 : vector<8x128xf32>
    %171 = vector.broadcast %151 : f32 to vector<8x128xf32>
    %172 = arith.maximumf %1, %171 : vector<8x128xf32>
    %173 = arith.subf %170, %172 : vector<8x128xf32>
    %cst_63 = arith.constant 1.000000e+00 : f32
    %174 = vector.broadcast %cst_63 : f32 to vector<8x128xf32>
    %175 = arith.addf %173, %174 : vector<8x128xf32>
    %cst_64 = arith.constant 0.000000e+00 : f32
    %176 = vector.broadcast %cst_64 : f32 to vector<8x128xf32>
    %177 = arith.maximumf %175, %176 : vector<8x128xf32>
    %178 = vector.broadcast %154 : f32 to vector<8x128xf32>
    %179 = arith.minimumf %7, %178 : vector<8x128xf32>
    %180 = vector.broadcast %152 : f32 to vector<8x128xf32>
    %181 = arith.maximumf %3, %180 : vector<8x128xf32>
    %182 = arith.subf %179, %181 : vector<8x128xf32>
    %cst_65 = arith.constant 1.000000e+00 : f32
    %183 = vector.broadcast %cst_65 : f32 to vector<8x128xf32>
    %184 = arith.addf %182, %183 : vector<8x128xf32>
    %cst_66 = arith.constant 0.000000e+00 : f32
    %185 = vector.broadcast %cst_66 : f32 to vector<8x128xf32>
    %186 = arith.maximumf %184, %185 : vector<8x128xf32>
    %187 = arith.mulf %177, %186 : vector<8x128xf32>
    %188 = vector.broadcast %160 : f32 to vector<8x128xf32>
    %189 = arith.addf %14, %188 : vector<8x128xf32>
    %190 = arith.subf %189, %187 : vector<8x128xf32>
    %cst_67 = arith.constant 9.99999993E-9 : f32
    %191 = vector.broadcast %cst_67 : f32 to vector<8x128xf32>
    %192 = arith.maximumf %190, %191 : vector<8x128xf32>
    %193 = arith.divf %187, %192 : vector<8x128xf32>
    %194 = vector.broadcast %168 : f32 to vector<8x128xf32>
    %195 = arith.mulf %193, %194 : vector<8x128xf32>
    %196 = arith.cmpf ogt, %195, %138 : vector<8x128xf32>
    %197 = arith.select %196, %195, %138 : vector<8x128xi1>, vector<8x128xf32>
    %cst_68 = arith.constant 2.000000e+00 : f32
    %198 = vector.broadcast %cst_68 : f32 to vector<8x128xf32>
    %199 = arith.select %196, %198, %140 : vector<8x128xi1>, vector<8x128xf32>
    %200 = vector.broadcast %155 : f32 to vector<8x128xf32>
    %201 = arith.select %196, %200, %142 : vector<8x128xi1>, vector<8x128xf32>
    %202 = vector.broadcast %151 : f32 to vector<8x128xf32>
    %203 = arith.select %196, %202, %144 : vector<8x128xi1>, vector<8x128xf32>
    %204 = vector.broadcast %152 : f32 to vector<8x128xf32>
    %205 = arith.select %196, %204, %146 : vector<8x128xi1>, vector<8x128xf32>
    %206 = vector.broadcast %153 : f32 to vector<8x128xf32>
    %207 = arith.select %196, %206, %148 : vector<8x128xi1>, vector<8x128xf32>
    %208 = vector.broadcast %154 : f32 to vector<8x128xf32>
    %209 = arith.select %196, %208, %150 : vector<8x128xi1>, vector<8x128xf32>
    %c3_69 = arith.constant 3 : index
    %210 = memref.load %arg1[%c3_69] : memref<80xf32, #tpu.memory_space<smem>>
    %c11 = arith.constant 11 : index
    %211 = memref.load %arg1[%c11] : memref<80xf32, #tpu.memory_space<smem>>
    %c19 = arith.constant 19 : index
    %212 = memref.load %arg1[%c19] : memref<80xf32, #tpu.memory_space<smem>>
    %c27 = arith.constant 27 : index
    %213 = memref.load %arg1[%c27] : memref<80xf32, #tpu.memory_space<smem>>
    %c35 = arith.constant 35 : index
    %214 = memref.load %arg1[%c35] : memref<80xf32, #tpu.memory_space<smem>>
    %215 = arith.subf %212, %210 : f32
    %cst_70 = arith.constant 1.000000e+00 : f32
    %216 = arith.addf %215, %cst_70 : f32
    %217 = arith.subf %213, %211 : f32
    %cst_71 = arith.constant 1.000000e+00 : f32
    %218 = arith.addf %217, %cst_71 : f32
    %219 = arith.mulf %216, %218 : f32
    %cst_72 = arith.constant 0.000000e+00 : f32
    %220 = arith.cmpf oeq, %210, %cst_72 : f32
    %cst_73 = arith.constant 0.000000e+00 : f32
    %221 = arith.cmpf oeq, %211, %cst_73 : f32
    %222 = arith.andi %220, %221 : i1
    %cst_74 = arith.constant 0.000000e+00 : f32
    %223 = arith.cmpf oeq, %212, %cst_74 : f32
    %224 = arith.andi %222, %223 : i1
    %cst_75 = arith.constant 0.000000e+00 : f32
    %225 = arith.cmpf oeq, %213, %cst_75 : f32
    %226 = arith.andi %224, %225 : i1
    %cst_76 = arith.constant 0.000000e+00 : f32
    %cst_77 = arith.constant 1.000000e+00 : f32
    %227 = arith.select %226, %cst_76, %cst_77 : f32
    %228 = vector.broadcast %212 : f32 to vector<8x128xf32>
    %229 = arith.minimumf %5, %228 : vector<8x128xf32>
    %230 = vector.broadcast %210 : f32 to vector<8x128xf32>
    %231 = arith.maximumf %1, %230 : vector<8x128xf32>
    %232 = arith.subf %229, %231 : vector<8x128xf32>
    %cst_78 = arith.constant 1.000000e+00 : f32
    %233 = vector.broadcast %cst_78 : f32 to vector<8x128xf32>
    %234 = arith.addf %232, %233 : vector<8x128xf32>
    %cst_79 = arith.constant 0.000000e+00 : f32
    %235 = vector.broadcast %cst_79 : f32 to vector<8x128xf32>
    %236 = arith.maximumf %234, %235 : vector<8x128xf32>
    %237 = vector.broadcast %213 : f32 to vector<8x128xf32>
    %238 = arith.minimumf %7, %237 : vector<8x128xf32>
    %239 = vector.broadcast %211 : f32 to vector<8x128xf32>
    %240 = arith.maximumf %3, %239 : vector<8x128xf32>
    %241 = arith.subf %238, %240 : vector<8x128xf32>
    %cst_80 = arith.constant 1.000000e+00 : f32
    %242 = vector.broadcast %cst_80 : f32 to vector<8x128xf32>
    %243 = arith.addf %241, %242 : vector<8x128xf32>
    %cst_81 = arith.constant 0.000000e+00 : f32
    %244 = vector.broadcast %cst_81 : f32 to vector<8x128xf32>
    %245 = arith.maximumf %243, %244 : vector<8x128xf32>
    %246 = arith.mulf %236, %245 : vector<8x128xf32>
    %247 = vector.broadcast %219 : f32 to vector<8x128xf32>
    %248 = arith.addf %14, %247 : vector<8x128xf32>
    %249 = arith.subf %248, %246 : vector<8x128xf32>
    %cst_82 = arith.constant 9.99999993E-9 : f32
    %250 = vector.broadcast %cst_82 : f32 to vector<8x128xf32>
    %251 = arith.maximumf %249, %250 : vector<8x128xf32>
    %252 = arith.divf %246, %251 : vector<8x128xf32>
    %253 = vector.broadcast %227 : f32 to vector<8x128xf32>
    %254 = arith.mulf %252, %253 : vector<8x128xf32>
    %255 = arith.cmpf ogt, %254, %197 : vector<8x128xf32>
    %256 = arith.select %255, %254, %197 : vector<8x128xi1>, vector<8x128xf32>
    %cst_83 = arith.constant 3.000000e+00 : f32
    %257 = vector.broadcast %cst_83 : f32 to vector<8x128xf32>
    %258 = arith.select %255, %257, %199 : vector<8x128xi1>, vector<8x128xf32>
    %259 = vector.broadcast %214 : f32 to vector<8x128xf32>
    %260 = arith.select %255, %259, %201 : vector<8x128xi1>, vector<8x128xf32>
    %261 = vector.broadcast %210 : f32 to vector<8x128xf32>
    %262 = arith.select %255, %261, %203 : vector<8x128xi1>, vector<8x128xf32>
    %263 = vector.broadcast %211 : f32 to vector<8x128xf32>
    %264 = arith.select %255, %263, %205 : vector<8x128xi1>, vector<8x128xf32>
    %265 = vector.broadcast %212 : f32 to vector<8x128xf32>
    %266 = arith.select %255, %265, %207 : vector<8x128xi1>, vector<8x128xf32>
    %267 = vector.broadcast %213 : f32 to vector<8x128xf32>
    %268 = arith.select %255, %267, %209 : vector<8x128xi1>, vector<8x128xf32>
    %c4 = arith.constant 4 : index
    %269 = memref.load %arg1[%c4] : memref<80xf32, #tpu.memory_space<smem>>
    %c12 = arith.constant 12 : index
    %270 = memref.load %arg1[%c12] : memref<80xf32, #tpu.memory_space<smem>>
    %c20 = arith.constant 20 : index
    %271 = memref.load %arg1[%c20] : memref<80xf32, #tpu.memory_space<smem>>
    %c28 = arith.constant 28 : index
    %272 = memref.load %arg1[%c28] : memref<80xf32, #tpu.memory_space<smem>>
    %c36 = arith.constant 36 : index
    %273 = memref.load %arg1[%c36] : memref<80xf32, #tpu.memory_space<smem>>
    %274 = arith.subf %271, %269 : f32
    %cst_84 = arith.constant 1.000000e+00 : f32
    %275 = arith.addf %274, %cst_84 : f32
    %276 = arith.subf %272, %270 : f32
    %cst_85 = arith.constant 1.000000e+00 : f32
    %277 = arith.addf %276, %cst_85 : f32
    %278 = arith.mulf %275, %277 : f32
    %cst_86 = arith.constant 0.000000e+00 : f32
    %279 = arith.cmpf oeq, %269, %cst_86 : f32
    %cst_87 = arith.constant 0.000000e+00 : f32
    %280 = arith.cmpf oeq, %270, %cst_87 : f32
    %281 = arith.andi %279, %280 : i1
    %cst_88 = arith.constant 0.000000e+00 : f32
    %282 = arith.cmpf oeq, %271, %cst_88 : f32
    %283 = arith.andi %281, %282 : i1
    %cst_89 = arith.constant 0.000000e+00 : f32
    %284 = arith.cmpf oeq, %272, %cst_89 : f32
    %285 = arith.andi %283, %284 : i1
    %cst_90 = arith.constant 0.000000e+00 : f32
    %cst_91 = arith.constant 1.000000e+00 : f32
    %286 = arith.select %285, %cst_90, %cst_91 : f32
    %287 = vector.broadcast %271 : f32 to vector<8x128xf32>
    %288 = arith.minimumf %5, %287 : vector<8x128xf32>
    %289 = vector.broadcast %269 : f32 to vector<8x128xf32>
    %290 = arith.maximumf %1, %289 : vector<8x128xf32>
    %291 = arith.subf %288, %290 : vector<8x128xf32>
    %cst_92 = arith.constant 1.000000e+00 : f32
    %292 = vector.broadcast %cst_92 : f32 to vector<8x128xf32>
    %293 = arith.addf %291, %292 : vector<8x128xf32>
    %cst_93 = arith.constant 0.000000e+00 : f32
    %294 = vector.broadcast %cst_93 : f32 to vector<8x128xf32>
    %295 = arith.maximumf %293, %294 : vector<8x128xf32>
    %296 = vector.broadcast %272 : f32 to vector<8x128xf32>
    %297 = arith.minimumf %7, %296 : vector<8x128xf32>
    %298 = vector.broadcast %270 : f32 to vector<8x128xf32>
    %299 = arith.maximumf %3, %298 : vector<8x128xf32>
    %300 = arith.subf %297, %299 : vector<8x128xf32>
    %cst_94 = arith.constant 1.000000e+00 : f32
    %301 = vector.broadcast %cst_94 : f32 to vector<8x128xf32>
    %302 = arith.addf %300, %301 : vector<8x128xf32>
    %cst_95 = arith.constant 0.000000e+00 : f32
    %303 = vector.broadcast %cst_95 : f32 to vector<8x128xf32>
    %304 = arith.maximumf %302, %303 : vector<8x128xf32>
    %305 = arith.mulf %295, %304 : vector<8x128xf32>
    %306 = vector.broadcast %278 : f32 to vector<8x128xf32>
    %307 = arith.addf %14, %306 : vector<8x128xf32>
    %308 = arith.subf %307, %305 : vector<8x128xf32>
    %cst_96 = arith.constant 9.99999993E-9 : f32
    %309 = vector.broadcast %cst_96 : f32 to vector<8x128xf32>
    %310 = arith.maximumf %308, %309 : vector<8x128xf32>
    %311 = arith.divf %305, %310 : vector<8x128xf32>
    %312 = vector.broadcast %286 : f32 to vector<8x128xf32>
    %313 = arith.mulf %311, %312 : vector<8x128xf32>
    %314 = arith.cmpf ogt, %313, %256 : vector<8x128xf32>
    %315 = arith.select %314, %313, %256 : vector<8x128xi1>, vector<8x128xf32>
    %cst_97 = arith.constant 4.000000e+00 : f32
    %316 = vector.broadcast %cst_97 : f32 to vector<8x128xf32>
    %317 = arith.select %314, %316, %258 : vector<8x128xi1>, vector<8x128xf32>
    %318 = vector.broadcast %273 : f32 to vector<8x128xf32>
    %319 = arith.select %314, %318, %260 : vector<8x128xi1>, vector<8x128xf32>
    %320 = vector.broadcast %269 : f32 to vector<8x128xf32>
    %321 = arith.select %314, %320, %262 : vector<8x128xi1>, vector<8x128xf32>
    %322 = vector.broadcast %270 : f32 to vector<8x128xf32>
    %323 = arith.select %314, %322, %264 : vector<8x128xi1>, vector<8x128xf32>
    %324 = vector.broadcast %271 : f32 to vector<8x128xf32>
    %325 = arith.select %314, %324, %266 : vector<8x128xi1>, vector<8x128xf32>
    %326 = vector.broadcast %272 : f32 to vector<8x128xf32>
    %327 = arith.select %314, %326, %268 : vector<8x128xi1>, vector<8x128xf32>
    %c5 = arith.constant 5 : index
    %328 = memref.load %arg1[%c5] : memref<80xf32, #tpu.memory_space<smem>>
    %c13 = arith.constant 13 : index
    %329 = memref.load %arg1[%c13] : memref<80xf32, #tpu.memory_space<smem>>
    %c21 = arith.constant 21 : index
    %330 = memref.load %arg1[%c21] : memref<80xf32, #tpu.memory_space<smem>>
    %c29 = arith.constant 29 : index
    %331 = memref.load %arg1[%c29] : memref<80xf32, #tpu.memory_space<smem>>
    %c37 = arith.constant 37 : index
    %332 = memref.load %arg1[%c37] : memref<80xf32, #tpu.memory_space<smem>>
    %333 = arith.subf %330, %328 : f32
    %cst_98 = arith.constant 1.000000e+00 : f32
    %334 = arith.addf %333, %cst_98 : f32
    %335 = arith.subf %331, %329 : f32
    %cst_99 = arith.constant 1.000000e+00 : f32
    %336 = arith.addf %335, %cst_99 : f32
    %337 = arith.mulf %334, %336 : f32
    %cst_100 = arith.constant 0.000000e+00 : f32
    %338 = arith.cmpf oeq, %328, %cst_100 : f32
    %cst_101 = arith.constant 0.000000e+00 : f32
    %339 = arith.cmpf oeq, %329, %cst_101 : f32
    %340 = arith.andi %338, %339 : i1
    %cst_102 = arith.constant 0.000000e+00 : f32
    %341 = arith.cmpf oeq, %330, %cst_102 : f32
    %342 = arith.andi %340, %341 : i1
    %cst_103 = arith.constant 0.000000e+00 : f32
    %343 = arith.cmpf oeq, %331, %cst_103 : f32
    %344 = arith.andi %342, %343 : i1
    %cst_104 = arith.constant 0.000000e+00 : f32
    %cst_105 = arith.constant 1.000000e+00 : f32
    %345 = arith.select %344, %cst_104, %cst_105 : f32
    %346 = vector.broadcast %330 : f32 to vector<8x128xf32>
    %347 = arith.minimumf %5, %346 : vector<8x128xf32>
    %348 = vector.broadcast %328 : f32 to vector<8x128xf32>
    %349 = arith.maximumf %1, %348 : vector<8x128xf32>
    %350 = arith.subf %347, %349 : vector<8x128xf32>
    %cst_106 = arith.constant 1.000000e+00 : f32
    %351 = vector.broadcast %cst_106 : f32 to vector<8x128xf32>
    %352 = arith.addf %350, %351 : vector<8x128xf32>
    %cst_107 = arith.constant 0.000000e+00 : f32
    %353 = vector.broadcast %cst_107 : f32 to vector<8x128xf32>
    %354 = arith.maximumf %352, %353 : vector<8x128xf32>
    %355 = vector.broadcast %331 : f32 to vector<8x128xf32>
    %356 = arith.minimumf %7, %355 : vector<8x128xf32>
    %357 = vector.broadcast %329 : f32 to vector<8x128xf32>
    %358 = arith.maximumf %3, %357 : vector<8x128xf32>
    %359 = arith.subf %356, %358 : vector<8x128xf32>
    %cst_108 = arith.constant 1.000000e+00 : f32
    %360 = vector.broadcast %cst_108 : f32 to vector<8x128xf32>
    %361 = arith.addf %359, %360 : vector<8x128xf32>
    %cst_109 = arith.constant 0.000000e+00 : f32
    %362 = vector.broadcast %cst_109 : f32 to vector<8x128xf32>
    %363 = arith.maximumf %361, %362 : vector<8x128xf32>
    %364 = arith.mulf %354, %363 : vector<8x128xf32>
    %365 = vector.broadcast %337 : f32 to vector<8x128xf32>
    %366 = arith.addf %14, %365 : vector<8x128xf32>
    %367 = arith.subf %366, %364 : vector<8x128xf32>
    %cst_110 = arith.constant 9.99999993E-9 : f32
    %368 = vector.broadcast %cst_110 : f32 to vector<8x128xf32>
    %369 = arith.maximumf %367, %368 : vector<8x128xf32>
    %370 = arith.divf %364, %369 : vector<8x128xf32>
    %371 = vector.broadcast %345 : f32 to vector<8x128xf32>
    %372 = arith.mulf %370, %371 : vector<8x128xf32>
    %373 = arith.cmpf ogt, %372, %315 : vector<8x128xf32>
    %374 = arith.select %373, %372, %315 : vector<8x128xi1>, vector<8x128xf32>
    %cst_111 = arith.constant 5.000000e+00 : f32
    %375 = vector.broadcast %cst_111 : f32 to vector<8x128xf32>
    %376 = arith.select %373, %375, %317 : vector<8x128xi1>, vector<8x128xf32>
    %377 = vector.broadcast %332 : f32 to vector<8x128xf32>
    %378 = arith.select %373, %377, %319 : vector<8x128xi1>, vector<8x128xf32>
    %379 = vector.broadcast %328 : f32 to vector<8x128xf32>
    %380 = arith.select %373, %379, %321 : vector<8x128xi1>, vector<8x128xf32>
    %381 = vector.broadcast %329 : f32 to vector<8x128xf32>
    %382 = arith.select %373, %381, %323 : vector<8x128xi1>, vector<8x128xf32>
    %383 = vector.broadcast %330 : f32 to vector<8x128xf32>
    %384 = arith.select %373, %383, %325 : vector<8x128xi1>, vector<8x128xf32>
    %385 = vector.broadcast %331 : f32 to vector<8x128xf32>
    %386 = arith.select %373, %385, %327 : vector<8x128xi1>, vector<8x128xf32>
    %c6 = arith.constant 6 : index
    %387 = memref.load %arg1[%c6] : memref<80xf32, #tpu.memory_space<smem>>
    %c14 = arith.constant 14 : index
    %388 = memref.load %arg1[%c14] : memref<80xf32, #tpu.memory_space<smem>>
    %c22 = arith.constant 22 : index
    %389 = memref.load %arg1[%c22] : memref<80xf32, #tpu.memory_space<smem>>
    %c30 = arith.constant 30 : index
    %390 = memref.load %arg1[%c30] : memref<80xf32, #tpu.memory_space<smem>>
    %c38 = arith.constant 38 : index
    %391 = memref.load %arg1[%c38] : memref<80xf32, #tpu.memory_space<smem>>
    %392 = arith.subf %389, %387 : f32
    %cst_112 = arith.constant 1.000000e+00 : f32
    %393 = arith.addf %392, %cst_112 : f32
    %394 = arith.subf %390, %388 : f32
    %cst_113 = arith.constant 1.000000e+00 : f32
    %395 = arith.addf %394, %cst_113 : f32
    %396 = arith.mulf %393, %395 : f32
    %cst_114 = arith.constant 0.000000e+00 : f32
    %397 = arith.cmpf oeq, %387, %cst_114 : f32
    %cst_115 = arith.constant 0.000000e+00 : f32
    %398 = arith.cmpf oeq, %388, %cst_115 : f32
    %399 = arith.andi %397, %398 : i1
    %cst_116 = arith.constant 0.000000e+00 : f32
    %400 = arith.cmpf oeq, %389, %cst_116 : f32
    %401 = arith.andi %399, %400 : i1
    %cst_117 = arith.constant 0.000000e+00 : f32
    %402 = arith.cmpf oeq, %390, %cst_117 : f32
    %403 = arith.andi %401, %402 : i1
    %cst_118 = arith.constant 0.000000e+00 : f32
    %cst_119 = arith.constant 1.000000e+00 : f32
    %404 = arith.select %403, %cst_118, %cst_119 : f32
    %405 = vector.broadcast %389 : f32 to vector<8x128xf32>
    %406 = arith.minimumf %5, %405 : vector<8x128xf32>
    %407 = vector.broadcast %387 : f32 to vector<8x128xf32>
    %408 = arith.maximumf %1, %407 : vector<8x128xf32>
    %409 = arith.subf %406, %408 : vector<8x128xf32>
    %cst_120 = arith.constant 1.000000e+00 : f32
    %410 = vector.broadcast %cst_120 : f32 to vector<8x128xf32>
    %411 = arith.addf %409, %410 : vector<8x128xf32>
    %cst_121 = arith.constant 0.000000e+00 : f32
    %412 = vector.broadcast %cst_121 : f32 to vector<8x128xf32>
    %413 = arith.maximumf %411, %412 : vector<8x128xf32>
    %414 = vector.broadcast %390 : f32 to vector<8x128xf32>
    %415 = arith.minimumf %7, %414 : vector<8x128xf32>
    %416 = vector.broadcast %388 : f32 to vector<8x128xf32>
    %417 = arith.maximumf %3, %416 : vector<8x128xf32>
    %418 = arith.subf %415, %417 : vector<8x128xf32>
    %cst_122 = arith.constant 1.000000e+00 : f32
    %419 = vector.broadcast %cst_122 : f32 to vector<8x128xf32>
    %420 = arith.addf %418, %419 : vector<8x128xf32>
    %cst_123 = arith.constant 0.000000e+00 : f32
    %421 = vector.broadcast %cst_123 : f32 to vector<8x128xf32>
    %422 = arith.maximumf %420, %421 : vector<8x128xf32>
    %423 = arith.mulf %413, %422 : vector<8x128xf32>
    %424 = vector.broadcast %396 : f32 to vector<8x128xf32>
    %425 = arith.addf %14, %424 : vector<8x128xf32>
    %426 = arith.subf %425, %423 : vector<8x128xf32>
    %cst_124 = arith.constant 9.99999993E-9 : f32
    %427 = vector.broadcast %cst_124 : f32 to vector<8x128xf32>
    %428 = arith.maximumf %426, %427 : vector<8x128xf32>
    %429 = arith.divf %423, %428 : vector<8x128xf32>
    %430 = vector.broadcast %404 : f32 to vector<8x128xf32>
    %431 = arith.mulf %429, %430 : vector<8x128xf32>
    %432 = arith.cmpf ogt, %431, %374 : vector<8x128xf32>
    %433 = arith.select %432, %431, %374 : vector<8x128xi1>, vector<8x128xf32>
    %cst_125 = arith.constant 6.000000e+00 : f32
    %434 = vector.broadcast %cst_125 : f32 to vector<8x128xf32>
    %435 = arith.select %432, %434, %376 : vector<8x128xi1>, vector<8x128xf32>
    %436 = vector.broadcast %391 : f32 to vector<8x128xf32>
    %437 = arith.select %432, %436, %378 : vector<8x128xi1>, vector<8x128xf32>
    %438 = vector.broadcast %387 : f32 to vector<8x128xf32>
    %439 = arith.select %432, %438, %380 : vector<8x128xi1>, vector<8x128xf32>
    %440 = vector.broadcast %388 : f32 to vector<8x128xf32>
    %441 = arith.select %432, %440, %382 : vector<8x128xi1>, vector<8x128xf32>
    %442 = vector.broadcast %389 : f32 to vector<8x128xf32>
    %443 = arith.select %432, %442, %384 : vector<8x128xi1>, vector<8x128xf32>
    %444 = vector.broadcast %390 : f32 to vector<8x128xf32>
    %445 = arith.select %432, %444, %386 : vector<8x128xi1>, vector<8x128xf32>
    %c7 = arith.constant 7 : index
    %446 = memref.load %arg1[%c7] : memref<80xf32, #tpu.memory_space<smem>>
    %c15 = arith.constant 15 : index
    %447 = memref.load %arg1[%c15] : memref<80xf32, #tpu.memory_space<smem>>
    %c23 = arith.constant 23 : index
    %448 = memref.load %arg1[%c23] : memref<80xf32, #tpu.memory_space<smem>>
    %c31 = arith.constant 31 : index
    %449 = memref.load %arg1[%c31] : memref<80xf32, #tpu.memory_space<smem>>
    %c39 = arith.constant 39 : index
    %450 = memref.load %arg1[%c39] : memref<80xf32, #tpu.memory_space<smem>>
    %451 = arith.subf %448, %446 : f32
    %cst_126 = arith.constant 1.000000e+00 : f32
    %452 = arith.addf %451, %cst_126 : f32
    %453 = arith.subf %449, %447 : f32
    %cst_127 = arith.constant 1.000000e+00 : f32
    %454 = arith.addf %453, %cst_127 : f32
    %455 = arith.mulf %452, %454 : f32
    %cst_128 = arith.constant 0.000000e+00 : f32
    %456 = arith.cmpf oeq, %446, %cst_128 : f32
    %cst_129 = arith.constant 0.000000e+00 : f32
    %457 = arith.cmpf oeq, %447, %cst_129 : f32
    %458 = arith.andi %456, %457 : i1
    %cst_130 = arith.constant 0.000000e+00 : f32
    %459 = arith.cmpf oeq, %448, %cst_130 : f32
    %460 = arith.andi %458, %459 : i1
    %cst_131 = arith.constant 0.000000e+00 : f32
    %461 = arith.cmpf oeq, %449, %cst_131 : f32
    %462 = arith.andi %460, %461 : i1
    %cst_132 = arith.constant 0.000000e+00 : f32
    %cst_133 = arith.constant 1.000000e+00 : f32
    %463 = arith.select %462, %cst_132, %cst_133 : f32
    %464 = vector.broadcast %448 : f32 to vector<8x128xf32>
    %465 = arith.minimumf %5, %464 : vector<8x128xf32>
    %466 = vector.broadcast %446 : f32 to vector<8x128xf32>
    %467 = arith.maximumf %1, %466 : vector<8x128xf32>
    %468 = arith.subf %465, %467 : vector<8x128xf32>
    %cst_134 = arith.constant 1.000000e+00 : f32
    %469 = vector.broadcast %cst_134 : f32 to vector<8x128xf32>
    %470 = arith.addf %468, %469 : vector<8x128xf32>
    %cst_135 = arith.constant 0.000000e+00 : f32
    %471 = vector.broadcast %cst_135 : f32 to vector<8x128xf32>
    %472 = arith.maximumf %470, %471 : vector<8x128xf32>
    %473 = vector.broadcast %449 : f32 to vector<8x128xf32>
    %474 = arith.minimumf %7, %473 : vector<8x128xf32>
    %475 = vector.broadcast %447 : f32 to vector<8x128xf32>
    %476 = arith.maximumf %3, %475 : vector<8x128xf32>
    %477 = arith.subf %474, %476 : vector<8x128xf32>
    %cst_136 = arith.constant 1.000000e+00 : f32
    %478 = vector.broadcast %cst_136 : f32 to vector<8x128xf32>
    %479 = arith.addf %477, %478 : vector<8x128xf32>
    %cst_137 = arith.constant 0.000000e+00 : f32
    %480 = vector.broadcast %cst_137 : f32 to vector<8x128xf32>
    %481 = arith.maximumf %479, %480 : vector<8x128xf32>
    %482 = arith.mulf %472, %481 : vector<8x128xf32>
    %483 = vector.broadcast %455 : f32 to vector<8x128xf32>
    %484 = arith.addf %14, %483 : vector<8x128xf32>
    %485 = arith.subf %484, %482 : vector<8x128xf32>
    %cst_138 = arith.constant 9.99999993E-9 : f32
    %486 = vector.broadcast %cst_138 : f32 to vector<8x128xf32>
    %487 = arith.maximumf %485, %486 : vector<8x128xf32>
    %488 = arith.divf %482, %487 : vector<8x128xf32>
    %489 = vector.broadcast %463 : f32 to vector<8x128xf32>
    %490 = arith.mulf %488, %489 : vector<8x128xf32>
    %491 = arith.cmpf ogt, %490, %433 : vector<8x128xf32>
    %492 = arith.select %491, %490, %433 : vector<8x128xi1>, vector<8x128xf32>
    %cst_139 = arith.constant 7.000000e+00 : f32
    %493 = vector.broadcast %cst_139 : f32 to vector<8x128xf32>
    %494 = arith.select %491, %493, %435 : vector<8x128xi1>, vector<8x128xf32>
    %495 = vector.broadcast %450 : f32 to vector<8x128xf32>
    %496 = arith.select %491, %495, %437 : vector<8x128xi1>, vector<8x128xf32>
    %497 = vector.broadcast %446 : f32 to vector<8x128xf32>
    %498 = arith.select %491, %497, %439 : vector<8x128xi1>, vector<8x128xf32>
    %499 = vector.broadcast %447 : f32 to vector<8x128xf32>
    %500 = arith.select %491, %499, %441 : vector<8x128xi1>, vector<8x128xf32>
    %501 = vector.broadcast %448 : f32 to vector<8x128xf32>
    %502 = arith.select %491, %501, %443 : vector<8x128xi1>, vector<8x128xf32>
    %503 = vector.broadcast %449 : f32 to vector<8x128xf32>
    %504 = arith.select %491, %503, %445 : vector<8x128xi1>, vector<8x128xf32>
    %cst_140 = arith.constant -1.000000e+00 : f32
    %505 = vector.broadcast %cst_140 : f32 to vector<8x128xf32>
    %506 = arith.select %25, %505, %492 : vector<8x128xi1>, vector<8x128xf32>
    %cst_141 = arith.constant 9.99999997E-7 : f32
    %507 = vector.broadcast %cst_141 : f32 to vector<8x128xf32>
    %508 = arith.maximumf %10, %507 : vector<8x128xf32>
    %cst_142 = arith.constant 9.99999997E-7 : f32
    %509 = vector.broadcast %cst_142 : f32 to vector<8x128xf32>
    %510 = arith.maximumf %13, %509 : vector<8x128xf32>
    %cst_143 = arith.constant 5.000000e-01 : f32
    %511 = vector.broadcast %cst_143 : f32 to vector<8x128xf32>
    %512 = arith.mulf %511, %10 : vector<8x128xf32>
    %513 = arith.addf %1, %512 : vector<8x128xf32>
    %cst_144 = arith.constant 5.000000e-01 : f32
    %514 = vector.broadcast %cst_144 : f32 to vector<8x128xf32>
    %515 = arith.mulf %514, %13 : vector<8x128xf32>
    %516 = arith.addf %3, %515 : vector<8x128xf32>
    %517 = arith.subf %502, %498 : vector<8x128xf32>
    %cst_145 = arith.constant 1.000000e+00 : f32
    %518 = vector.broadcast %cst_145 : f32 to vector<8x128xf32>
    %519 = arith.addf %517, %518 : vector<8x128xf32>
    %520 = arith.subf %504, %500 : vector<8x128xf32>
    %cst_146 = arith.constant 1.000000e+00 : f32
    %521 = vector.broadcast %cst_146 : f32 to vector<8x128xf32>
    %522 = arith.addf %520, %521 : vector<8x128xf32>
    %cst_147 = arith.constant 5.000000e-01 : f32
    %523 = vector.broadcast %cst_147 : f32 to vector<8x128xf32>
    %524 = arith.mulf %523, %519 : vector<8x128xf32>
    %525 = arith.addf %498, %524 : vector<8x128xf32>
    %cst_148 = arith.constant 5.000000e-01 : f32
    %526 = vector.broadcast %cst_148 : f32 to vector<8x128xf32>
    %527 = arith.mulf %526, %522 : vector<8x128xf32>
    %528 = arith.addf %500, %527 : vector<8x128xf32>
    %cst_149 = arith.constant 9.99999997E-7 : f32
    %529 = vector.broadcast %cst_149 : f32 to vector<8x128xf32>
    %530 = arith.maximumf %519, %529 : vector<8x128xf32>
    %cst_150 = arith.constant 9.99999997E-7 : f32
    %531 = vector.broadcast %cst_150 : f32 to vector<8x128xf32>
    %532 = arith.maximumf %522, %531 : vector<8x128xf32>
    %533 = arith.subf %525, %513 : vector<8x128xf32>
    %534 = arith.divf %533, %508 : vector<8x128xf32>
    %535 = arith.subf %528, %516 : vector<8x128xf32>
    %536 = arith.divf %535, %510 : vector<8x128xf32>
    %537 = arith.divf %530, %508 : vector<8x128xf32>
    %538 = math.log %537 : vector<8x128xf32>
    %539 = arith.divf %532, %510 : vector<8x128xf32>
    %540 = math.log %539 : vector<8x128xf32>
    %c0_151 = arith.constant 0 : index
    %c0_152 = arith.constant 0 : index
    %c0_153 = arith.constant 0 : index
    %c0_154 = arith.constant 0 : index
    %541 = vector.load %arg2[%c0_151, %c0_152, %c0_153, %c0_154] : memref<2x7x8x128xf32, #tpu.memory_space<vmem>>, vector<1x1x8x128xf32>
    %542 = vector.shape_cast %541 : vector<1x1x8x128xf32> to vector<8x128xf32>
    %543 = vector.shape_cast %506 : vector<8x128xf32> to vector<1x1x8x128xf32>
    tpu.vector_store %arg2[%c0_151, %c0_152, %c0_153, %c0_154], %543 {strides = array<i32>} : memref<2x7x8x128xf32, #tpu.memory_space<vmem>>, vector<1x1x8x128xf32>,
    %c0_155 = arith.constant 0 : index
    %c1_156 = arith.constant 1 : index
    %c0_157 = arith.constant 0 : index
    %c0_158 = arith.constant 0 : index
    %544 = vector.load %arg2[%c0_155, %c1_156, %c0_157, %c0_158] : memref<2x7x8x128xf32, #tpu.memory_space<vmem>>, vector<1x1x8x128xf32>
    %545 = vector.shape_cast %544 : vector<1x1x8x128xf32> to vector<8x128xf32>
    %546 = vector.shape_cast %494 : vector<8x128xf32> to vector<1x1x8x128xf32>
    tpu.vector_store %arg2[%c0_155, %c1_156, %c0_157, %c0_158], %546 {strides = array<i32>} : memref<2x7x8x128xf32, #tpu.memory_space<vmem>>, vector<1x1x8x128xf32>,
    %c0_159 = arith.constant 0 : index
    %c2_160 = arith.constant 2 : index
    %c0_161 = arith.constant 0 : index
    %c0_162 = arith.constant 0 : index
    %547 = vector.load %arg2[%c0_159, %c2_160, %c0_161, %c0_162] : memref<2x7x8x128xf32, #tpu.memory_space<vmem>>, vector<1x1x8x128xf32>
    %548 = vector.shape_cast %547 : vector<1x1x8x128xf32> to vector<8x128xf32>
    %549 = vector.shape_cast %496 : vector<8x128xf32> to vector<1x1x8x128xf32>
    tpu.vector_store %arg2[%c0_159, %c2_160, %c0_161, %c0_162], %549 {strides = array<i32>} : memref<2x7x8x128xf32, #tpu.memory_space<vmem>>, vector<1x1x8x128xf32>,
    %cst_163 = arith.constant 1.000000e+01 : f32
    %550 = vector.broadcast %cst_163 : f32 to vector<8x128xf32>
    %551 = arith.mulf %534, %550 : vector<8x128xf32>
    %c0_164 = arith.constant 0 : index
    %c3_165 = arith.constant 3 : index
    %c0_166 = arith.constant 0 : index
    %c0_167 = arith.constant 0 : index
    %552 = vector.load %arg2[%c0_164, %c3_165, %c0_166, %c0_167] : memref<2x7x8x128xf32, #tpu.memory_space<vmem>>, vector<1x1x8x128xf32>
    %553 = vector.shape_cast %552 : vector<1x1x8x128xf32> to vector<8x128xf32>
    %554 = vector.shape_cast %551 : vector<8x128xf32> to vector<1x1x8x128xf32>
    tpu.vector_store %arg2[%c0_164, %c3_165, %c0_166, %c0_167], %554 {strides = array<i32>} : memref<2x7x8x128xf32, #tpu.memory_space<vmem>>, vector<1x1x8x128xf32>,
    %cst_168 = arith.constant 1.000000e+01 : f32
    %555 = vector.broadcast %cst_168 : f32 to vector<8x128xf32>
    %556 = arith.mulf %536, %555 : vector<8x128xf32>
    %c0_169 = arith.constant 0 : index
    %c4_170 = arith.constant 4 : index
    %c0_171 = arith.constant 0 : index
    %c0_172 = arith.constant 0 : index
    %557 = vector.load %arg2[%c0_169, %c4_170, %c0_171, %c0_172] : memref<2x7x8x128xf32, #tpu.memory_space<vmem>>, vector<1x1x8x128xf32>
    %558 = vector.shape_cast %557 : vector<1x1x8x128xf32> to vector<8x128xf32>
    %559 = vector.shape_cast %556 : vector<8x128xf32> to vector<1x1x8x128xf32>
    tpu.vector_store %arg2[%c0_169, %c4_170, %c0_171, %c0_172], %559 {strides = array<i32>} : memref<2x7x8x128xf32, #tpu.memory_space<vmem>>, vector<1x1x8x128xf32>,
    %cst_173 = arith.constant 5.000000e+00 : f32
    %560 = vector.broadcast %cst_173 : f32 to vector<8x128xf32>
    %561 = arith.mulf %538, %560 : vector<8x128xf32>
    %c0_174 = arith.constant 0 : index
    %c5_175 = arith.constant 5 : index
    %c0_176 = arith.constant 0 : index
    %c0_177 = arith.constant 0 : index
    %562 = vector.load %arg2[%c0_174, %c5_175, %c0_176, %c0_177] : memref<2x7x8x128xf32, #tpu.memory_space<vmem>>, vector<1x1x8x128xf32>
    %563 = vector.shape_cast %562 : vector<1x1x8x128xf32> to vector<8x128xf32>
    %564 = vector.shape_cast %561 : vector<8x128xf32> to vector<1x1x8x128xf32>
    tpu.vector_store %arg2[%c0_174, %c5_175, %c0_176, %c0_177], %564 {strides = array<i32>} : memref<2x7x8x128xf32, #tpu.memory_space<vmem>>, vector<1x1x8x128xf32>,
    %cst_178 = arith.constant 5.000000e+00 : f32
    %565 = vector.broadcast %cst_178 : f32 to vector<8x128xf32>
    %566 = arith.mulf %540, %565 : vector<8x128xf32>
    %c0_179 = arith.constant 0 : index
    %c6_180 = arith.constant 6 : index
    %c0_181 = arith.constant 0 : index
    %c0_182 = arith.constant 0 : index
    %567 = vector.load %arg2[%c0_179, %c6_180, %c0_181, %c0_182] : memref<2x7x8x128xf32, #tpu.memory_space<vmem>>, vector<1x1x8x128xf32>
    %568 = vector.shape_cast %567 : vector<1x1x8x128xf32> to vector<8x128xf32>
    %569 = vector.shape_cast %566 : vector<8x128xf32> to vector<1x1x8x128xf32>
    tpu.vector_store %arg2[%c0_179, %c6_180, %c0_181, %c0_182], %569 {strides = array<i32>} : memref<2x7x8x128xf32, #tpu.memory_space<vmem>>, vector<1x1x8x128xf32>,
    %c1_183 = arith.constant 1 : index
    %c0_184 = arith.constant 0 : index
    %c0_185 = arith.constant 0 : index
    %c0_186 = arith.constant 0 : index
    %570 = vector.load %arg0[%c1_183, %c0_184, %c0_185, %c0_186] : memref<2x4x8x128xf32, #tpu.memory_space<vmem>>, vector<1x1x8x128xf32>
    %571 = vector.shape_cast %570 : vector<1x1x8x128xf32> to vector<8x128xf32>
    %c1_187 = arith.constant 1 : index
    %c1_188 = arith.constant 1 : index
    %c0_189 = arith.constant 0 : index
    %c0_190 = arith.constant 0 : index
    %572 = vector.load %arg0[%c1_187, %c1_188, %c0_189, %c0_190] : memref<2x4x8x128xf32, #tpu.memory_space<vmem>>, vector<1x1x8x128xf32>
    %573 = vector.shape_cast %572 : vector<1x1x8x128xf32> to vector<8x128xf32>
    %c1_191 = arith.constant 1 : index
    %c2_192 = arith.constant 2 : index
    %c0_193 = arith.constant 0 : index
    %c0_194 = arith.constant 0 : index
    %574 = vector.load %arg0[%c1_191, %c2_192, %c0_193, %c0_194] : memref<2x4x8x128xf32, #tpu.memory_space<vmem>>, vector<1x1x8x128xf32>
    %575 = vector.shape_cast %574 : vector<1x1x8x128xf32> to vector<8x128xf32>
    %c1_195 = arith.constant 1 : index
    %c3_196 = arith.constant 3 : index
    %c0_197 = arith.constant 0 : index
    %c0_198 = arith.constant 0 : index
    %576 = vector.load %arg0[%c1_195, %c3_196, %c0_197, %c0_198] : memref<2x4x8x128xf32, #tpu.memory_space<vmem>>, vector<1x1x8x128xf32>
    %577 = vector.shape_cast %576 : vector<1x1x8x128xf32> to vector<8x128xf32>
    %578 = arith.subf %575, %571 : vector<8x128xf32>
    %cst_199 = arith.constant 1.000000e+00 : f32
    %579 = vector.broadcast %cst_199 : f32 to vector<8x128xf32>
    %580 = arith.addf %578, %579 : vector<8x128xf32>
    %581 = arith.subf %577, %573 : vector<8x128xf32>
    %cst_200 = arith.constant 1.000000e+00 : f32
    %582 = vector.broadcast %cst_200 : f32 to vector<8x128xf32>
    %583 = arith.addf %581, %582 : vector<8x128xf32>
    %584 = arith.mulf %580, %583 : vector<8x128xf32>
    %cst_201 = arith.constant 0.000000e+00 : f32
    %585 = vector.broadcast %cst_201 : f32 to vector<8x128xf32>
    %586 = arith.cmpf oeq, %571, %585 : vector<8x128xf32>
    %cst_202 = arith.constant 0.000000e+00 : f32
    %587 = vector.broadcast %cst_202 : f32 to vector<8x128xf32>
    %588 = arith.cmpf oeq, %573, %587 : vector<8x128xf32>
    %589 = arith.andi %586, %588 : vector<8x128xi1>
    %cst_203 = arith.constant 0.000000e+00 : f32
    %590 = vector.broadcast %cst_203 : f32 to vector<8x128xf32>
    %591 = arith.cmpf oeq, %575, %590 : vector<8x128xf32>
    %592 = arith.andi %589, %591 : vector<8x128xi1>
    %cst_204 = arith.constant 0.000000e+00 : f32
    %593 = vector.broadcast %cst_204 : f32 to vector<8x128xf32>
    %594 = arith.cmpf oeq, %577, %593 : vector<8x128xf32>
    %595 = arith.andi %592, %594 : vector<8x128xi1>
    %cst_205 = arith.constant 0xFF800000 : f32
    %596 = vector.broadcast %cst_205 : f32 to vector<8x128xf32>
    %cst_206 = arith.constant 0.000000e+00 : f32
    %597 = vector.broadcast %cst_206 : f32 to vector<8x128xf32>
    %cst_207 = arith.constant 0.000000e+00 : f32
    %598 = vector.broadcast %cst_207 : f32 to vector<8x128xf32>
    %cst_208 = arith.constant 0.000000e+00 : f32
    %599 = vector.broadcast %cst_208 : f32 to vector<8x128xf32>
    %cst_209 = arith.constant 0.000000e+00 : f32
    %600 = vector.broadcast %cst_209 : f32 to vector<8x128xf32>
    %cst_210 = arith.constant 0.000000e+00 : f32
    %601 = vector.broadcast %cst_210 : f32 to vector<8x128xf32>
    %cst_211 = arith.constant 0.000000e+00 : f32
    %602 = vector.broadcast %cst_211 : f32 to vector<8x128xf32>
    %c40 = arith.constant 40 : index
    %603 = memref.load %arg1[%c40] : memref<80xf32, #tpu.memory_space<smem>>
    %c48 = arith.constant 48 : index
    %604 = memref.load %arg1[%c48] : memref<80xf32, #tpu.memory_space<smem>>
    %c56 = arith.constant 56 : index
    %605 = memref.load %arg1[%c56] : memref<80xf32, #tpu.memory_space<smem>>
    %c64 = arith.constant 64 : index
    %606 = memref.load %arg1[%c64] : memref<80xf32, #tpu.memory_space<smem>>
    %c72 = arith.constant 72 : index
    %607 = memref.load %arg1[%c72] : memref<80xf32, #tpu.memory_space<smem>>
    %608 = arith.subf %605, %603 : f32
    %cst_212 = arith.constant 1.000000e+00 : f32
    %609 = arith.addf %608, %cst_212 : f32
    %610 = arith.subf %606, %604 : f32
    %cst_213 = arith.constant 1.000000e+00 : f32
    %611 = arith.addf %610, %cst_213 : f32
    %612 = arith.mulf %609, %611 : f32
    %cst_214 = arith.constant 0.000000e+00 : f32
    %613 = arith.cmpf oeq, %603, %cst_214 : f32
    %cst_215 = arith.constant 0.000000e+00 : f32
    %614 = arith.cmpf oeq, %604, %cst_215 : f32
    %615 = arith.andi %613, %614 : i1
    %cst_216 = arith.constant 0.000000e+00 : f32
    %616 = arith.cmpf oeq, %605, %cst_216 : f32
    %617 = arith.andi %615, %616 : i1
    %cst_217 = arith.constant 0.000000e+00 : f32
    %618 = arith.cmpf oeq, %606, %cst_217 : f32
    %619 = arith.andi %617, %618 : i1
    %cst_218 = arith.constant 0.000000e+00 : f32
    %cst_219 = arith.constant 1.000000e+00 : f32
    %620 = arith.select %619, %cst_218, %cst_219 : f32
    %621 = vector.broadcast %605 : f32 to vector<8x128xf32>
    %622 = arith.minimumf %575, %621 : vector<8x128xf32>
    %623 = vector.broadcast %603 : f32 to vector<8x128xf32>
    %624 = arith.maximumf %571, %623 : vector<8x128xf32>
    %625 = arith.subf %622, %624 : vector<8x128xf32>
    %cst_220 = arith.constant 1.000000e+00 : f32
    %626 = vector.broadcast %cst_220 : f32 to vector<8x128xf32>
    %627 = arith.addf %625, %626 : vector<8x128xf32>
    %cst_221 = arith.constant 0.000000e+00 : f32
    %628 = vector.broadcast %cst_221 : f32 to vector<8x128xf32>
    %629 = arith.maximumf %627, %628 : vector<8x128xf32>
    %630 = vector.broadcast %606 : f32 to vector<8x128xf32>
    %631 = arith.minimumf %577, %630 : vector<8x128xf32>
    %632 = vector.broadcast %604 : f32 to vector<8x128xf32>
    %633 = arith.maximumf %573, %632 : vector<8x128xf32>
    %634 = arith.subf %631, %633 : vector<8x128xf32>
    %cst_222 = arith.constant 1.000000e+00 : f32
    %635 = vector.broadcast %cst_222 : f32 to vector<8x128xf32>
    %636 = arith.addf %634, %635 : vector<8x128xf32>
    %cst_223 = arith.constant 0.000000e+00 : f32
    %637 = vector.broadcast %cst_223 : f32 to vector<8x128xf32>
    %638 = arith.maximumf %636, %637 : vector<8x128xf32>
    %639 = arith.mulf %629, %638 : vector<8x128xf32>
    %640 = vector.broadcast %612 : f32 to vector<8x128xf32>
    %641 = arith.addf %584, %640 : vector<8x128xf32>
    %642 = arith.subf %641, %639 : vector<8x128xf32>
    %cst_224 = arith.constant 9.99999993E-9 : f32
    %643 = vector.broadcast %cst_224 : f32 to vector<8x128xf32>
    %644 = arith.maximumf %642, %643 : vector<8x128xf32>
    %645 = arith.divf %639, %644 : vector<8x128xf32>
    %646 = vector.broadcast %620 : f32 to vector<8x128xf32>
    %647 = arith.mulf %645, %646 : vector<8x128xf32>
    %648 = arith.cmpf ogt, %647, %596 : vector<8x128xf32>
    %649 = arith.select %648, %647, %596 : vector<8x128xi1>, vector<8x128xf32>
    %cst_225 = arith.constant 0.000000e+00 : f32
    %650 = vector.broadcast %cst_225 : f32 to vector<8x128xf32>
    %651 = arith.select %648, %650, %597 : vector<8x128xi1>, vector<8x128xf32>
    %652 = vector.broadcast %607 : f32 to vector<8x128xf32>
    %653 = arith.select %648, %652, %598 : vector<8x128xi1>, vector<8x128xf32>
    %654 = vector.broadcast %603 : f32 to vector<8x128xf32>
    %655 = arith.select %648, %654, %599 : vector<8x128xi1>, vector<8x128xf32>
    %656 = vector.broadcast %604 : f32 to vector<8x128xf32>
    %657 = arith.select %648, %656, %600 : vector<8x128xi1>, vector<8x128xf32>
    %658 = vector.broadcast %605 : f32 to vector<8x128xf32>
    %659 = arith.select %648, %658, %601 : vector<8x128xi1>, vector<8x128xf32>
    %660 = vector.broadcast %606 : f32 to vector<8x128xf32>
    %661 = arith.select %648, %660, %602 : vector<8x128xi1>, vector<8x128xf32>
    %c41 = arith.constant 41 : index
    %662 = memref.load %arg1[%c41] : memref<80xf32, #tpu.memory_space<smem>>
    %c49 = arith.constant 49 : index
    %663 = memref.load %arg1[%c49] : memref<80xf32, #tpu.memory_space<smem>>
    %c57 = arith.constant 57 : index
    %664 = memref.load %arg1[%c57] : memref<80xf32, #tpu.memory_space<smem>>
    %c65 = arith.constant 65 : index
    %665 = memref.load %arg1[%c65] : memref<80xf32, #tpu.memory_space<smem>>
    %c73 = arith.constant 73 : index
    %666 = memref.load %arg1[%c73] : memref<80xf32, #tpu.memory_space<smem>>
    %667 = arith.subf %664, %662 : f32
    %cst_226 = arith.constant 1.000000e+00 : f32
    %668 = arith.addf %667, %cst_226 : f32
    %669 = arith.subf %665, %663 : f32
    %cst_227 = arith.constant 1.000000e+00 : f32
    %670 = arith.addf %669, %cst_227 : f32
    %671 = arith.mulf %668, %670 : f32
    %cst_228 = arith.constant 0.000000e+00 : f32
    %672 = arith.cmpf oeq, %662, %cst_228 : f32
    %cst_229 = arith.constant 0.000000e+00 : f32
    %673 = arith.cmpf oeq, %663, %cst_229 : f32
    %674 = arith.andi %672, %673 : i1
    %cst_230 = arith.constant 0.000000e+00 : f32
    %675 = arith.cmpf oeq, %664, %cst_230 : f32
    %676 = arith.andi %674, %675 : i1
    %cst_231 = arith.constant 0.000000e+00 : f32
    %677 = arith.cmpf oeq, %665, %cst_231 : f32
    %678 = arith.andi %676, %677 : i1
    %cst_232 = arith.constant 0.000000e+00 : f32
    %cst_233 = arith.constant 1.000000e+00 : f32
    %679 = arith.select %678, %cst_232, %cst_233 : f32
    %680 = vector.broadcast %664 : f32 to vector<8x128xf32>
    %681 = arith.minimumf %575, %680 : vector<8x128xf32>
    %682 = vector.broadcast %662 : f32 to vector<8x128xf32>
    %683 = arith.maximumf %571, %682 : vector<8x128xf32>
    %684 = arith.subf %681, %683 : vector<8x128xf32>
    %cst_234 = arith.constant 1.000000e+00 : f32
    %685 = vector.broadcast %cst_234 : f32 to vector<8x128xf32>
    %686 = arith.addf %684, %685 : vector<8x128xf32>
    %cst_235 = arith.constant 0.000000e+00 : f32
    %687 = vector.broadcast %cst_235 : f32 to vector<8x128xf32>
    %688 = arith.maximumf %686, %687 : vector<8x128xf32>
    %689 = vector.broadcast %665 : f32 to vector<8x128xf32>
    %690 = arith.minimumf %577, %689 : vector<8x128xf32>
    %691 = vector.broadcast %663 : f32 to vector<8x128xf32>
    %692 = arith.maximumf %573, %691 : vector<8x128xf32>
    %693 = arith.subf %690, %692 : vector<8x128xf32>
    %cst_236 = arith.constant 1.000000e+00 : f32
    %694 = vector.broadcast %cst_236 : f32 to vector<8x128xf32>
    %695 = arith.addf %693, %694 : vector<8x128xf32>
    %cst_237 = arith.constant 0.000000e+00 : f32
    %696 = vector.broadcast %cst_237 : f32 to vector<8x128xf32>
    %697 = arith.maximumf %695, %696 : vector<8x128xf32>
    %698 = arith.mulf %688, %697 : vector<8x128xf32>
    %699 = vector.broadcast %671 : f32 to vector<8x128xf32>
    %700 = arith.addf %584, %699 : vector<8x128xf32>
    %701 = arith.subf %700, %698 : vector<8x128xf32>
    %cst_238 = arith.constant 9.99999993E-9 : f32
    %702 = vector.broadcast %cst_238 : f32 to vector<8x128xf32>
    %703 = arith.maximumf %701, %702 : vector<8x128xf32>
    %704 = arith.divf %698, %703 : vector<8x128xf32>
    %705 = vector.broadcast %679 : f32 to vector<8x128xf32>
    %706 = arith.mulf %704, %705 : vector<8x128xf32>
    %707 = arith.cmpf ogt, %706, %649 : vector<8x128xf32>
    %708 = arith.select %707, %706, %649 : vector<8x128xi1>, vector<8x128xf32>
    %cst_239 = arith.constant 1.000000e+00 : f32
    %709 = vector.broadcast %cst_239 : f32 to vector<8x128xf32>
    %710 = arith.select %707, %709, %651 : vector<8x128xi1>, vector<8x128xf32>
    %711 = vector.broadcast %666 : f32 to vector<8x128xf32>
    %712 = arith.select %707, %711, %653 : vector<8x128xi1>, vector<8x128xf32>
    %713 = vector.broadcast %662 : f32 to vector<8x128xf32>
    %714 = arith.select %707, %713, %655 : vector<8x128xi1>, vector<8x128xf32>
    %715 = vector.broadcast %663 : f32 to vector<8x128xf32>
    %716 = arith.select %707, %715, %657 : vector<8x128xi1>, vector<8x128xf32>
    %717 = vector.broadcast %664 : f32 to vector<8x128xf32>
    %718 = arith.select %707, %717, %659 : vector<8x128xi1>, vector<8x128xf32>
    %719 = vector.broadcast %665 : f32 to vector<8x128xf32>
    %720 = arith.select %707, %719, %661 : vector<8x128xi1>, vector<8x128xf32>
    %c42 = arith.constant 42 : index
    %721 = memref.load %arg1[%c42] : memref<80xf32, #tpu.memory_space<smem>>
    %c50 = arith.constant 50 : index
    %722 = memref.load %arg1[%c50] : memref<80xf32, #tpu.memory_space<smem>>
    %c58 = arith.constant 58 : index
    %723 = memref.load %arg1[%c58] : memref<80xf32, #tpu.memory_space<smem>>
    %c66 = arith.constant 66 : index
    %724 = memref.load %arg1[%c66] : memref<80xf32, #tpu.memory_space<smem>>
    %c74 = arith.constant 74 : index
    %725 = memref.load %arg1[%c74] : memref<80xf32, #tpu.memory_space<smem>>
    %726 = arith.subf %723, %721 : f32
    %cst_240 = arith.constant 1.000000e+00 : f32
    %727 = arith.addf %726, %cst_240 : f32
    %728 = arith.subf %724, %722 : f32
    %cst_241 = arith.constant 1.000000e+00 : f32
    %729 = arith.addf %728, %cst_241 : f32
    %730 = arith.mulf %727, %729 : f32
    %cst_242 = arith.constant 0.000000e+00 : f32
    %731 = arith.cmpf oeq, %721, %cst_242 : f32
    %cst_243 = arith.constant 0.000000e+00 : f32
    %732 = arith.cmpf oeq, %722, %cst_243 : f32
    %733 = arith.andi %731, %732 : i1
    %cst_244 = arith.constant 0.000000e+00 : f32
    %734 = arith.cmpf oeq, %723, %cst_244 : f32
    %735 = arith.andi %733, %734 : i1
    %cst_245 = arith.constant 0.000000e+00 : f32
    %736 = arith.cmpf oeq, %724, %cst_245 : f32
    %737 = arith.andi %735, %736 : i1
    %cst_246 = arith.constant 0.000000e+00 : f32
    %cst_247 = arith.constant 1.000000e+00 : f32
    %738 = arith.select %737, %cst_246, %cst_247 : f32
    %739 = vector.broadcast %723 : f32 to vector<8x128xf32>
    %740 = arith.minimumf %575, %739 : vector<8x128xf32>
    %741 = vector.broadcast %721 : f32 to vector<8x128xf32>
    %742 = arith.maximumf %571, %741 : vector<8x128xf32>
    %743 = arith.subf %740, %742 : vector<8x128xf32>
    %cst_248 = arith.constant 1.000000e+00 : f32
    %744 = vector.broadcast %cst_248 : f32 to vector<8x128xf32>
    %745 = arith.addf %743, %744 : vector<8x128xf32>
    %cst_249 = arith.constant 0.000000e+00 : f32
    %746 = vector.broadcast %cst_249 : f32 to vector<8x128xf32>
    %747 = arith.maximumf %745, %746 : vector<8x128xf32>
    %748 = vector.broadcast %724 : f32 to vector<8x128xf32>
    %749 = arith.minimumf %577, %748 : vector<8x128xf32>
    %750 = vector.broadcast %722 : f32 to vector<8x128xf32>
    %751 = arith.maximumf %573, %750 : vector<8x128xf32>
    %752 = arith.subf %749, %751 : vector<8x128xf32>
    %cst_250 = arith.constant 1.000000e+00 : f32
    %753 = vector.broadcast %cst_250 : f32 to vector<8x128xf32>
    %754 = arith.addf %752, %753 : vector<8x128xf32>
    %cst_251 = arith.constant 0.000000e+00 : f32
    %755 = vector.broadcast %cst_251 : f32 to vector<8x128xf32>
    %756 = arith.maximumf %754, %755 : vector<8x128xf32>
    %757 = arith.mulf %747, %756 : vector<8x128xf32>
    %758 = vector.broadcast %730 : f32 to vector<8x128xf32>
    %759 = arith.addf %584, %758 : vector<8x128xf32>
    %760 = arith.subf %759, %757 : vector<8x128xf32>
    %cst_252 = arith.constant 9.99999993E-9 : f32
    %761 = vector.broadcast %cst_252 : f32 to vector<8x128xf32>
    %762 = arith.maximumf %760, %761 : vector<8x128xf32>
    %763 = arith.divf %757, %762 : vector<8x128xf32>
    %764 = vector.broadcast %738 : f32 to vector<8x128xf32>
    %765 = arith.mulf %763, %764 : vector<8x128xf32>
    %766 = arith.cmpf ogt, %765, %708 : vector<8x128xf32>
    %767 = arith.select %766, %765, %708 : vector<8x128xi1>, vector<8x128xf32>
    %cst_253 = arith.constant 2.000000e+00 : f32
    %768 = vector.broadcast %cst_253 : f32 to vector<8x128xf32>
    %769 = arith.select %766, %768, %710 : vector<8x128xi1>, vector<8x128xf32>
    %770 = vector.broadcast %725 : f32 to vector<8x128xf32>
    %771 = arith.select %766, %770, %712 : vector<8x128xi1>, vector<8x128xf32>
    %772 = vector.broadcast %721 : f32 to vector<8x128xf32>
    %773 = arith.select %766, %772, %714 : vector<8x128xi1>, vector<8x128xf32>
    %774 = vector.broadcast %722 : f32 to vector<8x128xf32>
    %775 = arith.select %766, %774, %716 : vector<8x128xi1>, vector<8x128xf32>
    %776 = vector.broadcast %723 : f32 to vector<8x128xf32>
    %777 = arith.select %766, %776, %718 : vector<8x128xi1>, vector<8x128xf32>
    %778 = vector.broadcast %724 : f32 to vector<8x128xf32>
    %779 = arith.select %766, %778, %720 : vector<8x128xi1>, vector<8x128xf32>
    %c43 = arith.constant 43 : index
    %780 = memref.load %arg1[%c43] : memref<80xf32, #tpu.memory_space<smem>>
    %c51 = arith.constant 51 : index
    %781 = memref.load %arg1[%c51] : memref<80xf32, #tpu.memory_space<smem>>
    %c59 = arith.constant 59 : index
    %782 = memref.load %arg1[%c59] : memref<80xf32, #tpu.memory_space<smem>>
    %c67 = arith.constant 67 : index
    %783 = memref.load %arg1[%c67] : memref<80xf32, #tpu.memory_space<smem>>
    %c75 = arith.constant 75 : index
    %784 = memref.load %arg1[%c75] : memref<80xf32, #tpu.memory_space<smem>>
    %785 = arith.subf %782, %780 : f32
    %cst_254 = arith.constant 1.000000e+00 : f32
    %786 = arith.addf %785, %cst_254 : f32
    %787 = arith.subf %783, %781 : f32
    %cst_255 = arith.constant 1.000000e+00 : f32
    %788 = arith.addf %787, %cst_255 : f32
    %789 = arith.mulf %786, %788 : f32
    %cst_256 = arith.constant 0.000000e+00 : f32
    %790 = arith.cmpf oeq, %780, %cst_256 : f32
    %cst_257 = arith.constant 0.000000e+00 : f32
    %791 = arith.cmpf oeq, %781, %cst_257 : f32
    %792 = arith.andi %790, %791 : i1
    %cst_258 = arith.constant 0.000000e+00 : f32
    %793 = arith.cmpf oeq, %782, %cst_258 : f32
    %794 = arith.andi %792, %793 : i1
    %cst_259 = arith.constant 0.000000e+00 : f32
    %795 = arith.cmpf oeq, %783, %cst_259 : f32
    %796 = arith.andi %794, %795 : i1
    %cst_260 = arith.constant 0.000000e+00 : f32
    %cst_261 = arith.constant 1.000000e+00 : f32
    %797 = arith.select %796, %cst_260, %cst_261 : f32
    %798 = vector.broadcast %782 : f32 to vector<8x128xf32>
    %799 = arith.minimumf %575, %798 : vector<8x128xf32>
    %800 = vector.broadcast %780 : f32 to vector<8x128xf32>
    %801 = arith.maximumf %571, %800 : vector<8x128xf32>
    %802 = arith.subf %799, %801 : vector<8x128xf32>
    %cst_262 = arith.constant 1.000000e+00 : f32
    %803 = vector.broadcast %cst_262 : f32 to vector<8x128xf32>
    %804 = arith.addf %802, %803 : vector<8x128xf32>
    %cst_263 = arith.constant 0.000000e+00 : f32
    %805 = vector.broadcast %cst_263 : f32 to vector<8x128xf32>
    %806 = arith.maximumf %804, %805 : vector<8x128xf32>
    %807 = vector.broadcast %783 : f32 to vector<8x128xf32>
    %808 = arith.minimumf %577, %807 : vector<8x128xf32>
    %809 = vector.broadcast %781 : f32 to vector<8x128xf32>
    %810 = arith.maximumf %573, %809 : vector<8x128xf32>
    %811 = arith.subf %808, %810 : vector<8x128xf32>
    %cst_264 = arith.constant 1.000000e+00 : f32
    %812 = vector.broadcast %cst_264 : f32 to vector<8x128xf32>
    %813 = arith.addf %811, %812 : vector<8x128xf32>
    %cst_265 = arith.constant 0.000000e+00 : f32
    %814 = vector.broadcast %cst_265 : f32 to vector<8x128xf32>
    %815 = arith.maximumf %813, %814 : vector<8x128xf32>
    %816 = arith.mulf %806, %815 : vector<8x128xf32>
    %817 = vector.broadcast %789 : f32 to vector<8x128xf32>
    %818 = arith.addf %584, %817 : vector<8x128xf32>
    %819 = arith.subf %818, %816 : vector<8x128xf32>
    %cst_266 = arith.constant 9.99999993E-9 : f32
    %820 = vector.broadcast %cst_266 : f32 to vector<8x128xf32>
    %821 = arith.maximumf %819, %820 : vector<8x128xf32>
    %822 = arith.divf %816, %821 : vector<8x128xf32>
    %823 = vector.broadcast %797 : f32 to vector<8x128xf32>
    %824 = arith.mulf %822, %823 : vector<8x128xf32>
    %825 = arith.cmpf ogt, %824, %767 : vector<8x128xf32>
    %826 = arith.select %825, %824, %767 : vector<8x128xi1>, vector<8x128xf32>
    %cst_267 = arith.constant 3.000000e+00 : f32
    %827 = vector.broadcast %cst_267 : f32 to vector<8x128xf32>
    %828 = arith.select %825, %827, %769 : vector<8x128xi1>, vector<8x128xf32>
    %829 = vector.broadcast %784 : f32 to vector<8x128xf32>
    %830 = arith.select %825, %829, %771 : vector<8x128xi1>, vector<8x128xf32>
    %831 = vector.broadcast %780 : f32 to vector<8x128xf32>
    %832 = arith.select %825, %831, %773 : vector<8x128xi1>, vector<8x128xf32>
    %833 = vector.broadcast %781 : f32 to vector<8x128xf32>
    %834 = arith.select %825, %833, %775 : vector<8x128xi1>, vector<8x128xf32>
    %835 = vector.broadcast %782 : f32 to vector<8x128xf32>
    %836 = arith.select %825, %835, %777 : vector<8x128xi1>, vector<8x128xf32>
    %837 = vector.broadcast %783 : f32 to vector<8x128xf32>
    %838 = arith.select %825, %837, %779 : vector<8x128xi1>, vector<8x128xf32>
    %c44 = arith.constant 44 : index
    %839 = memref.load %arg1[%c44] : memref<80xf32, #tpu.memory_space<smem>>
    %c52 = arith.constant 52 : index
    %840 = memref.load %arg1[%c52] : memref<80xf32, #tpu.memory_space<smem>>
    %c60 = arith.constant 60 : index
    %841 = memref.load %arg1[%c60] : memref<80xf32, #tpu.memory_space<smem>>
    %c68 = arith.constant 68 : index
    %842 = memref.load %arg1[%c68] : memref<80xf32, #tpu.memory_space<smem>>
    %c76 = arith.constant 76 : index
    %843 = memref.load %arg1[%c76] : memref<80xf32, #tpu.memory_space<smem>>
    %844 = arith.subf %841, %839 : f32
    %cst_268 = arith.constant 1.000000e+00 : f32
    %845 = arith.addf %844, %cst_268 : f32
    %846 = arith.subf %842, %840 : f32
    %cst_269 = arith.constant 1.000000e+00 : f32
    %847 = arith.addf %846, %cst_269 : f32
    %848 = arith.mulf %845, %847 : f32
    %cst_270 = arith.constant 0.000000e+00 : f32
    %849 = arith.cmpf oeq, %839, %cst_270 : f32
    %cst_271 = arith.constant 0.000000e+00 : f32
    %850 = arith.cmpf oeq, %840, %cst_271 : f32
    %851 = arith.andi %849, %850 : i1
    %cst_272 = arith.constant 0.000000e+00 : f32
    %852 = arith.cmpf oeq, %841, %cst_272 : f32
    %853 = arith.andi %851, %852 : i1
    %cst_273 = arith.constant 0.000000e+00 : f32
    %854 = arith.cmpf oeq, %842, %cst_273 : f32
    %855 = arith.andi %853, %854 : i1
    %cst_274 = arith.constant 0.000000e+00 : f32
    %cst_275 = arith.constant 1.000000e+00 : f32
    %856 = arith.select %855, %cst_274, %cst_275 : f32
    %857 = vector.broadcast %841 : f32 to vector<8x128xf32>
    %858 = arith.minimumf %575, %857 : vector<8x128xf32>
    %859 = vector.broadcast %839 : f32 to vector<8x128xf32>
    %860 = arith.maximumf %571, %859 : vector<8x128xf32>
    %861 = arith.subf %858, %860 : vector<8x128xf32>
    %cst_276 = arith.constant 1.000000e+00 : f32
    %862 = vector.broadcast %cst_276 : f32 to vector<8x128xf32>
    %863 = arith.addf %861, %862 : vector<8x128xf32>
    %cst_277 = arith.constant 0.000000e+00 : f32
    %864 = vector.broadcast %cst_277 : f32 to vector<8x128xf32>
    %865 = arith.maximumf %863, %864 : vector<8x128xf32>
    %866 = vector.broadcast %842 : f32 to vector<8x128xf32>
    %867 = arith.minimumf %577, %866 : vector<8x128xf32>
    %868 = vector.broadcast %840 : f32 to vector<8x128xf32>
    %869 = arith.maximumf %573, %868 : vector<8x128xf32>
    %870 = arith.subf %867, %869 : vector<8x128xf32>
    %cst_278 = arith.constant 1.000000e+00 : f32
    %871 = vector.broadcast %cst_278 : f32 to vector<8x128xf32>
    %872 = arith.addf %870, %871 : vector<8x128xf32>
    %cst_279 = arith.constant 0.000000e+00 : f32
    %873 = vector.broadcast %cst_279 : f32 to vector<8x128xf32>
    %874 = arith.maximumf %872, %873 : vector<8x128xf32>
    %875 = arith.mulf %865, %874 : vector<8x128xf32>
    %876 = vector.broadcast %848 : f32 to vector<8x128xf32>
    %877 = arith.addf %584, %876 : vector<8x128xf32>
    %878 = arith.subf %877, %875 : vector<8x128xf32>
    %cst_280 = arith.constant 9.99999993E-9 : f32
    %879 = vector.broadcast %cst_280 : f32 to vector<8x128xf32>
    %880 = arith.maximumf %878, %879 : vector<8x128xf32>
    %881 = arith.divf %875, %880 : vector<8x128xf32>
    %882 = vector.broadcast %856 : f32 to vector<8x128xf32>
    %883 = arith.mulf %881, %882 : vector<8x128xf32>
    %884 = arith.cmpf ogt, %883, %826 : vector<8x128xf32>
    %885 = arith.select %884, %883, %826 : vector<8x128xi1>, vector<8x128xf32>
    %cst_281 = arith.constant 4.000000e+00 : f32
    %886 = vector.broadcast %cst_281 : f32 to vector<8x128xf32>
    %887 = arith.select %884, %886, %828 : vector<8x128xi1>, vector<8x128xf32>
    %888 = vector.broadcast %843 : f32 to vector<8x128xf32>
    %889 = arith.select %884, %888, %830 : vector<8x128xi1>, vector<8x128xf32>
    %890 = vector.broadcast %839 : f32 to vector<8x128xf32>
    %891 = arith.select %884, %890, %832 : vector<8x128xi1>, vector<8x128xf32>
    %892 = vector.broadcast %840 : f32 to vector<8x128xf32>
    %893 = arith.select %884, %892, %834 : vector<8x128xi1>, vector<8x128xf32>
    %894 = vector.broadcast %841 : f32 to vector<8x128xf32>
    %895 = arith.select %884, %894, %836 : vector<8x128xi1>, vector<8x128xf32>
    %896 = vector.broadcast %842 : f32 to vector<8x128xf32>
    %897 = arith.select %884, %896, %838 : vector<8x128xi1>, vector<8x128xf32>
    %c45 = arith.constant 45 : index
    %898 = memref.load %arg1[%c45] : memref<80xf32, #tpu.memory_space<smem>>
    %c53 = arith.constant 53 : index
    %899 = memref.load %arg1[%c53] : memref<80xf32, #tpu.memory_space<smem>>
    %c61 = arith.constant 61 : index
    %900 = memref.load %arg1[%c61] : memref<80xf32, #tpu.memory_space<smem>>
    %c69 = arith.constant 69 : index
    %901 = memref.load %arg1[%c69] : memref<80xf32, #tpu.memory_space<smem>>
    %c77 = arith.constant 77 : index
    %902 = memref.load %arg1[%c77] : memref<80xf32, #tpu.memory_space<smem>>
    %903 = arith.subf %900, %898 : f32
    %cst_282 = arith.constant 1.000000e+00 : f32
    %904 = arith.addf %903, %cst_282 : f32
    %905 = arith.subf %901, %899 : f32
    %cst_283 = arith.constant 1.000000e+00 : f32
    %906 = arith.addf %905, %cst_283 : f32
    %907 = arith.mulf %904, %906 : f32
    %cst_284 = arith.constant 0.000000e+00 : f32
    %908 = arith.cmpf oeq, %898, %cst_284 : f32
    %cst_285 = arith.constant 0.000000e+00 : f32
    %909 = arith.cmpf oeq, %899, %cst_285 : f32
    %910 = arith.andi %908, %909 : i1
    %cst_286 = arith.constant 0.000000e+00 : f32
    %911 = arith.cmpf oeq, %900, %cst_286 : f32
    %912 = arith.andi %910, %911 : i1
    %cst_287 = arith.constant 0.000000e+00 : f32
    %913 = arith.cmpf oeq, %901, %cst_287 : f32
    %914 = arith.andi %912, %913 : i1
    %cst_288 = arith.constant 0.000000e+00 : f32
    %cst_289 = arith.constant 1.000000e+00 : f32
    %915 = arith.select %914, %cst_288, %cst_289 : f32
    %916 = vector.broadcast %900 : f32 to vector<8x128xf32>
    %917 = arith.minimumf %575, %916 : vector<8x128xf32>
    %918 = vector.broadcast %898 : f32 to vector<8x128xf32>
    %919 = arith.maximumf %571, %918 : vector<8x128xf32>
    %920 = arith.subf %917, %919 : vector<8x128xf32>
    %cst_290 = arith.constant 1.000000e+00 : f32
    %921 = vector.broadcast %cst_290 : f32 to vector<8x128xf32>
    %922 = arith.addf %920, %921 : vector<8x128xf32>
    %cst_291 = arith.constant 0.000000e+00 : f32
    %923 = vector.broadcast %cst_291 : f32 to vector<8x128xf32>
    %924 = arith.maximumf %922, %923 : vector<8x128xf32>
    %925 = vector.broadcast %901 : f32 to vector<8x128xf32>
    %926 = arith.minimumf %577, %925 : vector<8x128xf32>
    %927 = vector.broadcast %899 : f32 to vector<8x128xf32>
    %928 = arith.maximumf %573, %927 : vector<8x128xf32>
    %929 = arith.subf %926, %928 : vector<8x128xf32>
    %cst_292 = arith.constant 1.000000e+00 : f32
    %930 = vector.broadcast %cst_292 : f32 to vector<8x128xf32>
    %931 = arith.addf %929, %930 : vector<8x128xf32>
    %cst_293 = arith.constant 0.000000e+00 : f32
    %932 = vector.broadcast %cst_293 : f32 to vector<8x128xf32>
    %933 = arith.maximumf %931, %932 : vector<8x128xf32>
    %934 = arith.mulf %924, %933 : vector<8x128xf32>
    %935 = vector.broadcast %907 : f32 to vector<8x128xf32>
    %936 = arith.addf %584, %935 : vector<8x128xf32>
    %937 = arith.subf %936, %934 : vector<8x128xf32>
    %cst_294 = arith.constant 9.99999993E-9 : f32
    %938 = vector.broadcast %cst_294 : f32 to vector<8x128xf32>
    %939 = arith.maximumf %937, %938 : vector<8x128xf32>
    %940 = arith.divf %934, %939 : vector<8x128xf32>
    %941 = vector.broadcast %915 : f32 to vector<8x128xf32>
    %942 = arith.mulf %940, %941 : vector<8x128xf32>
    %943 = arith.cmpf ogt, %942, %885 : vector<8x128xf32>
    %944 = arith.select %943, %942, %885 : vector<8x128xi1>, vector<8x128xf32>
    %cst_295 = arith.constant 5.000000e+00 : f32
    %945 = vector.broadcast %cst_295 : f32 to vector<8x128xf32>
    %946 = arith.select %943, %945, %887 : vector<8x128xi1>, vector<8x128xf32>
    %947 = vector.broadcast %902 : f32 to vector<8x128xf32>
    %948 = arith.select %943, %947, %889 : vector<8x128xi1>, vector<8x128xf32>
    %949 = vector.broadcast %898 : f32 to vector<8x128xf32>
    %950 = arith.select %943, %949, %891 : vector<8x128xi1>, vector<8x128xf32>
    %951 = vector.broadcast %899 : f32 to vector<8x128xf32>
    %952 = arith.select %943, %951, %893 : vector<8x128xi1>, vector<8x128xf32>
    %953 = vector.broadcast %900 : f32 to vector<8x128xf32>
    %954 = arith.select %943, %953, %895 : vector<8x128xi1>, vector<8x128xf32>
    %955 = vector.broadcast %901 : f32 to vector<8x128xf32>
    %956 = arith.select %943, %955, %897 : vector<8x128xi1>, vector<8x128xf32>
    %c46 = arith.constant 46 : index
    %957 = memref.load %arg1[%c46] : memref<80xf32, #tpu.memory_space<smem>>
    %c54 = arith.constant 54 : index
    %958 = memref.load %arg1[%c54] : memref<80xf32, #tpu.memory_space<smem>>
    %c62 = arith.constant 62 : index
    %959 = memref.load %arg1[%c62] : memref<80xf32, #tpu.memory_space<smem>>
    %c70 = arith.constant 70 : index
    %960 = memref.load %arg1[%c70] : memref<80xf32, #tpu.memory_space<smem>>
    %c78 = arith.constant 78 : index
    %961 = memref.load %arg1[%c78] : memref<80xf32, #tpu.memory_space<smem>>
    %962 = arith.subf %959, %957 : f32
    %cst_296 = arith.constant 1.000000e+00 : f32
    %963 = arith.addf %962, %cst_296 : f32
    %964 = arith.subf %960, %958 : f32
    %cst_297 = arith.constant 1.000000e+00 : f32
    %965 = arith.addf %964, %cst_297 : f32
    %966 = arith.mulf %963, %965 : f32
    %cst_298 = arith.constant 0.000000e+00 : f32
    %967 = arith.cmpf oeq, %957, %cst_298 : f32
    %cst_299 = arith.constant 0.000000e+00 : f32
    %968 = arith.cmpf oeq, %958, %cst_299 : f32
    %969 = arith.andi %967, %968 : i1
    %cst_300 = arith.constant 0.000000e+00 : f32
    %970 = arith.cmpf oeq, %959, %cst_300 : f32
    %971 = arith.andi %969, %970 : i1
    %cst_301 = arith.constant 0.000000e+00 : f32
    %972 = arith.cmpf oeq, %960, %cst_301 : f32
    %973 = arith.andi %971, %972 : i1
    %cst_302 = arith.constant 0.000000e+00 : f32
    %cst_303 = arith.constant 1.000000e+00 : f32
    %974 = arith.select %973, %cst_302, %cst_303 : f32
    %975 = vector.broadcast %959 : f32 to vector<8x128xf32>
    %976 = arith.minimumf %575, %975 : vector<8x128xf32>
    %977 = vector.broadcast %957 : f32 to vector<8x128xf32>
    %978 = arith.maximumf %571, %977 : vector<8x128xf32>
    %979 = arith.subf %976, %978 : vector<8x128xf32>
    %cst_304 = arith.constant 1.000000e+00 : f32
    %980 = vector.broadcast %cst_304 : f32 to vector<8x128xf32>
    %981 = arith.addf %979, %980 : vector<8x128xf32>
    %cst_305 = arith.constant 0.000000e+00 : f32
    %982 = vector.broadcast %cst_305 : f32 to vector<8x128xf32>
    %983 = arith.maximumf %981, %982 : vector<8x128xf32>
    %984 = vector.broadcast %960 : f32 to vector<8x128xf32>
    %985 = arith.minimumf %577, %984 : vector<8x128xf32>
    %986 = vector.broadcast %958 : f32 to vector<8x128xf32>
    %987 = arith.maximumf %573, %986 : vector<8x128xf32>
    %988 = arith.subf %985, %987 : vector<8x128xf32>
    %cst_306 = arith.constant 1.000000e+00 : f32
    %989 = vector.broadcast %cst_306 : f32 to vector<8x128xf32>
    %990 = arith.addf %988, %989 : vector<8x128xf32>
    %cst_307 = arith.constant 0.000000e+00 : f32
    %991 = vector.broadcast %cst_307 : f32 to vector<8x128xf32>
    %992 = arith.maximumf %990, %991 : vector<8x128xf32>
    %993 = arith.mulf %983, %992 : vector<8x128xf32>
    %994 = vector.broadcast %966 : f32 to vector<8x128xf32>
    %995 = arith.addf %584, %994 : vector<8x128xf32>
    %996 = arith.subf %995, %993 : vector<8x128xf32>
    %cst_308 = arith.constant 9.99999993E-9 : f32
    %997 = vector.broadcast %cst_308 : f32 to vector<8x128xf32>
    %998 = arith.maximumf %996, %997 : vector<8x128xf32>
    %999 = arith.divf %993, %998 : vector<8x128xf32>
    %1000 = vector.broadcast %974 : f32 to vector<8x128xf32>
    %1001 = arith.mulf %999, %1000 : vector<8x128xf32>
    %1002 = arith.cmpf ogt, %1001, %944 : vector<8x128xf32>
    %1003 = arith.select %1002, %1001, %944 : vector<8x128xi1>, vector<8x128xf32>
    %cst_309 = arith.constant 6.000000e+00 : f32
    %1004 = vector.broadcast %cst_309 : f32 to vector<8x128xf32>
    %1005 = arith.select %1002, %1004, %946 : vector<8x128xi1>, vector<8x128xf32>
    %1006 = vector.broadcast %961 : f32 to vector<8x128xf32>
    %1007 = arith.select %1002, %1006, %948 : vector<8x128xi1>, vector<8x128xf32>
    %1008 = vector.broadcast %957 : f32 to vector<8x128xf32>
    %1009 = arith.select %1002, %1008, %950 : vector<8x128xi1>, vector<8x128xf32>
    %1010 = vector.broadcast %958 : f32 to vector<8x128xf32>
    %1011 = arith.select %1002, %1010, %952 : vector<8x128xi1>, vector<8x128xf32>
    %1012 = vector.broadcast %959 : f32 to vector<8x128xf32>
    %1013 = arith.select %1002, %1012, %954 : vector<8x128xi1>, vector<8x128xf32>
    %1014 = vector.broadcast %960 : f32 to vector<8x128xf32>
    %1015 = arith.select %1002, %1014, %956 : vector<8x128xi1>, vector<8x128xf32>
    %c47 = arith.constant 47 : index
    %1016 = memref.load %arg1[%c47] : memref<80xf32, #tpu.memory_space<smem>>
    %c55 = arith.constant 55 : index
    %1017 = memref.load %arg1[%c55] : memref<80xf32, #tpu.memory_space<smem>>
    %c63 = arith.constant 63 : index
    %1018 = memref.load %arg1[%c63] : memref<80xf32, #tpu.memory_space<smem>>
    %c71 = arith.constant 71 : index
    %1019 = memref.load %arg1[%c71] : memref<80xf32, #tpu.memory_space<smem>>
    %c79 = arith.constant 79 : index
    %1020 = memref.load %arg1[%c79] : memref<80xf32, #tpu.memory_space<smem>>
    %1021 = arith.subf %1018, %1016 : f32
    %cst_310 = arith.constant 1.000000e+00 : f32
    %1022 = arith.addf %1021, %cst_310 : f32
    %1023 = arith.subf %1019, %1017 : f32
    %cst_311 = arith.constant 1.000000e+00 : f32
    %1024 = arith.addf %1023, %cst_311 : f32
    %1025 = arith.mulf %1022, %1024 : f32
    %cst_312 = arith.constant 0.000000e+00 : f32
    %1026 = arith.cmpf oeq, %1016, %cst_312 : f32
    %cst_313 = arith.constant 0.000000e+00 : f32
    %1027 = arith.cmpf oeq, %1017, %cst_313 : f32
    %1028 = arith.andi %1026, %1027 : i1
    %cst_314 = arith.constant 0.000000e+00 : f32
    %1029 = arith.cmpf oeq, %1018, %cst_314 : f32
    %1030 = arith.andi %1028, %1029 : i1
    %cst_315 = arith.constant 0.000000e+00 : f32
    %1031 = arith.cmpf oeq, %1019, %cst_315 : f32
    %1032 = arith.andi %1030, %1031 : i1
    %cst_316 = arith.constant 0.000000e+00 : f32
    %cst_317 = arith.constant 1.000000e+00 : f32
    %1033 = arith.select %1032, %cst_316, %cst_317 : f32
    %1034 = vector.broadcast %1018 : f32 to vector<8x128xf32>
    %1035 = arith.minimumf %575, %1034 : vector<8x128xf32>
    %1036 = vector.broadcast %1016 : f32 to vector<8x128xf32>
    %1037 = arith.maximumf %571, %1036 : vector<8x128xf32>
    %1038 = arith.subf %1035, %1037 : vector<8x128xf32>
    %cst_318 = arith.constant 1.000000e+00 : f32
    %1039 = vector.broadcast %cst_318 : f32 to vector<8x128xf32>
    %1040 = arith.addf %1038, %1039 : vector<8x128xf32>
    %cst_319 = arith.constant 0.000000e+00 : f32
    %1041 = vector.broadcast %cst_319 : f32 to vector<8x128xf32>
    %1042 = arith.maximumf %1040, %1041 : vector<8x128xf32>
    %1043 = vector.broadcast %1019 : f32 to vector<8x128xf32>
    %1044 = arith.minimumf %577, %1043 : vector<8x128xf32>
    %1045 = vector.broadcast %1017 : f32 to vector<8x128xf32>
    %1046 = arith.maximumf %573, %1045 : vector<8x128xf32>
    %1047 = arith.subf %1044, %1046 : vector<8x128xf32>
    %cst_320 = arith.constant 1.000000e+00 : f32
    %1048 = vector.broadcast %cst_320 : f32 to vector<8x128xf32>
    %1049 = arith.addf %1047, %1048 : vector<8x128xf32>
    %cst_321 = arith.constant 0.000000e+00 : f32
    %1050 = vector.broadcast %cst_321 : f32 to vector<8x128xf32>
    %1051 = arith.maximumf %1049, %1050 : vector<8x128xf32>
    %1052 = arith.mulf %1042, %1051 : vector<8x128xf32>
    %1053 = vector.broadcast %1025 : f32 to vector<8x128xf32>
    %1054 = arith.addf %584, %1053 : vector<8x128xf32>
    %1055 = arith.subf %1054, %1052 : vector<8x128xf32>
    %cst_322 = arith.constant 9.99999993E-9 : f32
    %1056 = vector.broadcast %cst_322 : f32 to vector<8x128xf32>
    %1057 = arith.maximumf %1055, %1056 : vector<8x128xf32>
    %1058 = arith.divf %1052, %1057 : vector<8x128xf32>
    %1059 = vector.broadcast %1033 : f32 to vector<8x128xf32>
    %1060 = arith.mulf %1058, %1059 : vector<8x128xf32>
    %1061 = arith.cmpf ogt, %1060, %1003 : vector<8x128xf32>
    %1062 = arith.select %1061, %1060, %1003 : vector<8x128xi1>, vector<8x128xf32>
    %cst_323 = arith.constant 7.000000e+00 : f32
    %1063 = vector.broadcast %cst_323 : f32 to vector<8x128xf32>
    %1064 = arith.select %1061, %1063, %1005 : vector<8x128xi1>, vector<8x128xf32>
    %1065 = vector.broadcast %1020 : f32 to vector<8x128xf32>
    %1066 = arith.select %1061, %1065, %1007 : vector<8x128xi1>, vector<8x128xf32>
    %1067 = vector.broadcast %1016 : f32 to vector<8x128xf32>
    %1068 = arith.select %1061, %1067, %1009 : vector<8x128xi1>, vector<8x128xf32>
    %1069 = vector.broadcast %1017 : f32 to vector<8x128xf32>
    %1070 = arith.select %1061, %1069, %1011 : vector<8x128xi1>, vector<8x128xf32>
    %1071 = vector.broadcast %1018 : f32 to vector<8x128xf32>
    %1072 = arith.select %1061, %1071, %1013 : vector<8x128xi1>, vector<8x128xf32>
    %1073 = vector.broadcast %1019 : f32 to vector<8x128xf32>
    %1074 = arith.select %1061, %1073, %1015 : vector<8x128xi1>, vector<8x128xf32>
    %cst_324 = arith.constant -1.000000e+00 : f32
    %1075 = vector.broadcast %cst_324 : f32 to vector<8x128xf32>
    %1076 = arith.select %595, %1075, %1062 : vector<8x128xi1>, vector<8x128xf32>
    %cst_325 = arith.constant 9.99999997E-7 : f32
    %1077 = vector.broadcast %cst_325 : f32 to vector<8x128xf32>
    %1078 = arith.maximumf %580, %1077 : vector<8x128xf32>
    %cst_326 = arith.constant 9.99999997E-7 : f32
    %1079 = vector.broadcast %cst_326 : f32 to vector<8x128xf32>
    %1080 = arith.maximumf %583, %1079 : vector<8x128xf32>
    %cst_327 = arith.constant 5.000000e-01 : f32
    %1081 = vector.broadcast %cst_327 : f32 to vector<8x128xf32>
    %1082 = arith.mulf %1081, %580 : vector<8x128xf32>
    %1083 = arith.addf %571, %1082 : vector<8x128xf32>
    %cst_328 = arith.constant 5.000000e-01 : f32
    %1084 = vector.broadcast %cst_328 : f32 to vector<8x128xf32>
    %1085 = arith.mulf %1084, %583 : vector<8x128xf32>
    %1086 = arith.addf %573, %1085 : vector<8x128xf32>
    %1087 = arith.subf %1072, %1068 : vector<8x128xf32>
    %cst_329 = arith.constant 1.000000e+00 : f32
    %1088 = vector.broadcast %cst_329 : f32 to vector<8x128xf32>
    %1089 = arith.addf %1087, %1088 : vector<8x128xf32>
    %1090 = arith.subf %1074, %1070 : vector<8x128xf32>
    %cst_330 = arith.constant 1.000000e+00 : f32
    %1091 = vector.broadcast %cst_330 : f32 to vector<8x128xf32>
    %1092 = arith.addf %1090, %1091 : vector<8x128xf32>
    %cst_331 = arith.constant 5.000000e-01 : f32
    %1093 = vector.broadcast %cst_331 : f32 to vector<8x128xf32>
    %1094 = arith.mulf %1093, %1089 : vector<8x128xf32>
    %1095 = arith.addf %1068, %1094 : vector<8x128xf32>
    %cst_332 = arith.constant 5.000000e-01 : f32
    %1096 = vector.broadcast %cst_332 : f32 to vector<8x128xf32>
    %1097 = arith.mulf %1096, %1092 : vector<8x128xf32>
    %1098 = arith.addf %1070, %1097 : vector<8x128xf32>
    %cst_333 = arith.constant 9.99999997E-7 : f32
    %1099 = vector.broadcast %cst_333 : f32 to vector<8x128xf32>
    %1100 = arith.maximumf %1089, %1099 : vector<8x128xf32>
    %cst_334 = arith.constant 9.99999997E-7 : f32
    %1101 = vector.broadcast %cst_334 : f32 to vector<8x128xf32>
    %1102 = arith.maximumf %1092, %1101 : vector<8x128xf32>
    %1103 = arith.subf %1095, %1083 : vector<8x128xf32>
    %1104 = arith.divf %1103, %1078 : vector<8x128xf32>
    %1105 = arith.subf %1098, %1086 : vector<8x128xf32>
    %1106 = arith.divf %1105, %1080 : vector<8x128xf32>
    %1107 = arith.divf %1100, %1078 : vector<8x128xf32>
    %1108 = math.log %1107 : vector<8x128xf32>
    %1109 = arith.divf %1102, %1080 : vector<8x128xf32>
    %1110 = math.log %1109 : vector<8x128xf32>
    %c1_335 = arith.constant 1 : index
    %c0_336 = arith.constant 0 : index
    %c0_337 = arith.constant 0 : index
    %c0_338 = arith.constant 0 : index
    %1111 = vector.load %arg2[%c1_335, %c0_336, %c0_337, %c0_338] : memref<2x7x8x128xf32, #tpu.memory_space<vmem>>, vector<1x1x8x128xf32>
    %1112 = vector.shape_cast %1111 : vector<1x1x8x128xf32> to vector<8x128xf32>
    %1113 = vector.shape_cast %1076 : vector<8x128xf32> to vector<1x1x8x128xf32>
    tpu.vector_store %arg2[%c1_335, %c0_336, %c0_337, %c0_338], %1113 {strides = array<i32>} : memref<2x7x8x128xf32, #tpu.memory_space<vmem>>, vector<1x1x8x128xf32>,
    %c1_339 = arith.constant 1 : index
    %c1_340 = arith.constant 1 : index
    %c0_341 = arith.constant 0 : index
    %c0_342 = arith.constant 0 : index
    %1114 = vector.load %arg2[%c1_339, %c1_340, %c0_341, %c0_342] : memref<2x7x8x128xf32, #tpu.memory_space<vmem>>, vector<1x1x8x128xf32>
    %1115 = vector.shape_cast %1114 : vector<1x1x8x128xf32> to vector<8x128xf32>
    %1116 = vector.shape_cast %1064 : vector<8x128xf32> to vector<1x1x8x128xf32>
    tpu.vector_store %arg2[%c1_339, %c1_340, %c0_341, %c0_342], %1116 {strides = array<i32>} : memref<2x7x8x128xf32, #tpu.memory_space<vmem>>, vector<1x1x8x128xf32>,
    %c1_343 = arith.constant 1 : index
    %c2_344 = arith.constant 2 : index
    %c0_345 = arith.constant 0 : index
    %c0_346 = arith.constant 0 : index
    %1117 = vector.load %arg2[%c1_343, %c2_344, %c0_345, %c0_346] : memref<2x7x8x128xf32, #tpu.memory_space<vmem>>, vector<1x1x8x128xf32>
    %1118 = vector.shape_cast %1117 : vector<1x1x8x128xf32> to vector<8x128xf32>
    %1119 = vector.shape_cast %1066 : vector<8x128xf32> to vector<1x1x8x128xf32>
    tpu.vector_store %arg2[%c1_343, %c2_344, %c0_345, %c0_346], %1119 {strides = array<i32>} : memref<2x7x8x128xf32, #tpu.memory_space<vmem>>, vector<1x1x8x128xf32>,
    %cst_347 = arith.constant 1.000000e+01 : f32
    %1120 = vector.broadcast %cst_347 : f32 to vector<8x128xf32>
    %1121 = arith.mulf %1104, %1120 : vector<8x128xf32>
    %c1_348 = arith.constant 1 : index
    %c3_349 = arith.constant 3 : index
    %c0_350 = arith.constant 0 : index
    %c0_351 = arith.constant 0 : index
    %1122 = vector.load %arg2[%c1_348, %c3_349, %c0_350, %c0_351] : memref<2x7x8x128xf32, #tpu.memory_space<vmem>>, vector<1x1x8x128xf32>
    %1123 = vector.shape_cast %1122 : vector<1x1x8x128xf32> to vector<8x128xf32>
    %1124 = vector.shape_cast %1121 : vector<8x128xf32> to vector<1x1x8x128xf32>
    tpu.vector_store %arg2[%c1_348, %c3_349, %c0_350, %c0_351], %1124 {strides = array<i32>} : memref<2x7x8x128xf32, #tpu.memory_space<vmem>>, vector<1x1x8x128xf32>,
    %cst_352 = arith.constant 1.000000e+01 : f32
    %1125 = vector.broadcast %cst_352 : f32 to vector<8x128xf32>
    %1126 = arith.mulf %1106, %1125 : vector<8x128xf32>
    %c1_353 = arith.constant 1 : index
    %c4_354 = arith.constant 4 : index
    %c0_355 = arith.constant 0 : index
    %c0_356 = arith.constant 0 : index
    %1127 = vector.load %arg2[%c1_353, %c4_354, %c0_355, %c0_356] : memref<2x7x8x128xf32, #tpu.memory_space<vmem>>, vector<1x1x8x128xf32>
    %1128 = vector.shape_cast %1127 : vector<1x1x8x128xf32> to vector<8x128xf32>
    %1129 = vector.shape_cast %1126 : vector<8x128xf32> to vector<1x1x8x128xf32>
    tpu.vector_store %arg2[%c1_353, %c4_354, %c0_355, %c0_356], %1129 {strides = array<i32>} : memref<2x7x8x128xf32, #tpu.memory_space<vmem>>, vector<1x1x8x128xf32>,
    %cst_357 = arith.constant 5.000000e+00 : f32
    %1130 = vector.broadcast %cst_357 : f32 to vector<8x128xf32>
    %1131 = arith.mulf %1108, %1130 : vector<8x128xf32>
    %c1_358 = arith.constant 1 : index
    %c5_359 = arith.constant 5 : index
    %c0_360 = arith.constant 0 : index
    %c0_361 = arith.constant 0 : index
    %1132 = vector.load %arg2[%c1_358, %c5_359, %c0_360, %c0_361] : memref<2x7x8x128xf32, #tpu.memory_space<vmem>>, vector<1x1x8x128xf32>
    %1133 = vector.shape_cast %1132 : vector<1x1x8x128xf32> to vector<8x128xf32>
    %1134 = vector.shape_cast %1131 : vector<8x128xf32> to vector<1x1x8x128xf32>
    tpu.vector_store %arg2[%c1_358, %c5_359, %c0_360, %c0_361], %1134 {strides = array<i32>} : memref<2x7x8x128xf32, #tpu.memory_space<vmem>>, vector<1x1x8x128xf32>,
    %cst_362 = arith.constant 5.000000e+00 : f32
    %1135 = vector.broadcast %cst_362 : f32 to vector<8x128xf32>
    %1136 = arith.mulf %1110, %1135 : vector<8x128xf32>
    %c1_363 = arith.constant 1 : index
    %c6_364 = arith.constant 6 : index
    %c0_365 = arith.constant 0 : index
    %c0_366 = arith.constant 0 : index
    %1137 = vector.load %arg2[%c1_363, %c6_364, %c0_365, %c0_366] : memref<2x7x8x128xf32, #tpu.memory_space<vmem>>, vector<1x1x8x128xf32>
    %1138 = vector.shape_cast %1137 : vector<1x1x8x128xf32> to vector<8x128xf32>
    %1139 = vector.shape_cast %1136 : vector<8x128xf32> to vector<1x1x8x128xf32>
    tpu.vector_store %arg2[%c1_363, %c6_364, %c0_365, %c0_366], %1139 {strides = array<i32>} : memref<2x7x8x128xf32, #tpu.memory_space<vmem>>, vector<1x1x8x128xf32>,
    return
  }
}

</mosaic_0001>

<llo_original>
// kernel: tpu_custom_call.1
$region0: #{tpu_custom_call.1}
  #allocation0 [shape = 'u32[]', space=smem, size = 0x4, offset = 0x4, fixed_abs, tag = 'smem constant byte address 0x4 - core index']
  #allocation1 [shape = 'u32[144,128]{1,0:T(1,128)}', space=vmem, size = 0x12000, scoped, tag = 'internal scratch']
  %s0 = inlined_call_operand.hbm [shape: f32[2,4,8,128], index: 0, kind: input, shape index: {}]
  %s1 = inlined_call_operand.vmem [shape: f32[80], index: 1, kind: input, shape index: {}]
  %s2 = inlined_call_operand.hbm [shape: f32[2,7,8,128], index: 2, kind: output, shape index: {}]
  %s3 = sld [smem:[#allocation0]]
  $region26: #{tpu_custom_call.1} parent=0
    _
  %s5 = ssub.s32 1, %s3
  %s6 = scalar_select 0, %s5, %s3
  $region1: #{tpu_custom_call.1} parent=0
    #allocation2 [shape = 'u8[32768]{0}', space=vmem, size = 0x8000, scoped, tag = 'input window, operand 0, single buffered']
    #allocation3 [shape = 's32[1]{0}', space=sflag, size = 0x4, scoped, tag = 'scoped memory for tpu_custom_call.1']
    #allocation4 [shape = 's32[1]{0}', space=sflag, size = 0x4, scoped, tag = 'scoped memory for tpu_custom_call.1']
    #allocation5 [shape = 's32[1]{0}', space=sflag, size = 0x4, scoped, tag = 'scoped memory for tpu_custom_call.1']
    #allocation6 [shape = 'u8[512]{0}', space=smem, size = 0x200, scoped, tag = 'input window, operand 1, single buffered']
    #allocation7 [shape = 'u8[57344]{0}', space=vmem, size = 0xe000, scoped, tag = 'output window, operand 0, single buffered']
    %7 = vsyncpa [#allocation3], 0
    %8 = vsyncpa [#allocation5], 0
    %9 = vsyncpa [#allocation4], 0
    // Predicated region
    $region2: #{tpu_custom_call.1} parent=1 // pred_check
      _
    $region3: #{tpu_custom_call.1} parent=1 // pred_check_branch
      %11 = sbr.rel (0) target = $region5
    $region4: #{tpu_custom_call.1} parent=1 // pred_region
      %s13 = ssub.s32 1024, 1024
      %14 = vsyncadd [#allocation3], %s13
      %s15 = sshll.u32 [#allocation2], 4
      %s16 = int_to_ptr.vmem [resolvable:$true] %s15
      %21 = dma.hbm_to_vmem [thread:$0]  %s0, 1024, %s16, [#allocation3], 128, 128, 8
    $region5: #{tpu_custom_call.1} parent=1 // pred_fallthru
      _
    // Predicated region
    $region6: #{tpu_custom_call.1} parent=1 // pred_check
      _
    $region7: #{tpu_custom_call.1} parent=1 // pred_check_branch
      %23 = sbr.rel (0) target = $region9
    $region8: #{tpu_custom_call.1} parent=1 // pred_region
      %s25 = ssub.s32 16, 16
      %26 = vsyncadd [#allocation5], %s25
      %s28 = sshll.u32 %s1, 4
      %s29 = int_to_ptr.vmem [resolvable:$true] %s28
      %31 = dma.vmem_to_smem %s29, 16, [#allocation6], [#allocation5]
    $region9: #{tpu_custom_call.1} parent=1 // pred_fallthru
      _
    // Predicated region
    $region10: #{tpu_custom_call.1} parent=1 // pred_check
      _
    $region11: #{tpu_custom_call.1} parent=1 // pred_check_branch
      %33 = sbr.rel (0) target = $region13
    $region12: #{tpu_custom_call.1} parent=1 // pred_region
      %34 = dma.done [#allocation3], 1024
    $region13: #{tpu_custom_call.1} parent=1 // pred_fallthru
      _
    // Predicated region
    $region14: #{tpu_custom_call.1} parent=1 // pred_check
      _
    $region15: #{tpu_custom_call.1} parent=1 // pred_check_branch
      %36 = sbr.rel (0) target = $region17
    $region16: #{tpu_custom_call.1} parent=1 // pred_region
      %37 = dma.done [#allocation5], 16
    $region17: #{tpu_custom_call.1} parent=1 // pred_fallthru
      _
    %38 = sfence
    %v39 = vld [vmem:[#allocation2] sm:$0xff]
    %s40 = scalar_lea.vmem [#allocation2], 8
    %v41 = vld [vmem:[%s40] sm:$0xff]
    %s42 = scalar_lea.vmem [#allocation2], 16
    %v43 = vld [vmem:[%s42] sm:$0xff]
    %s44 = scalar_lea.vmem [#allocation2], 24
    %v45 = vld [vmem:[%s44] sm:$0xff]
    %v46 = vsub.f32 %v43, %v39
    %v47 = vadd.f32 %v46, 1.0
    %v48 = vsub.f32 %v45, %v41
    %v49 = vadd.f32 %v48, 1.0
    %v50 = vmul.f32 %v47, %v49
    %vm51 = vcmp.eq.f32.partialorder %v39, 0.0
    %vm52 = vcmp.eq.f32.partialorder %v41, 0.0
    %vm53 = vmand %vm51, %vm52
    %vm54 = vcmp.eq.f32.partialorder %v43, 0.0
    %vm55 = vmand %vm53, %vm54
    %vm56 = vcmp.eq.f32.partialorder %v45, 0.0
    %vm57 = vmand %vm55, %vm56
    %s58 = sld [smem:[#allocation6]]
    %s59 = sld [smem:[#allocation6 + $0x8]]
    %s60 = sld [smem:[#allocation6 + $0x10]]
    %s61 = sld [smem:[#allocation6 + $0x18]]
    %s62 = sld [smem:[#allocation6 + $0x20]]
    %s63 = ssub.f32 %s60, %s58
    %s64 = sadd.f32 %s63, 1.0
    %s65 = ssub.f32 %s61, %s59
    %s66 = sadd.f32 %s65, 1.0
    %s67 = smul.f32 %s64, %s66
    %p68 = scmp.eq.f32.partialorder %s58, 0.0
    %p69 = scmp.eq.f32.partialorder %s59, 0.0
    %p70 = pnand %p68, %p69
    %p71 = pneg %p70
    %p72 = scmp.eq.f32.partialorder %s60, 0.0
    %p73 = pnand %p71, %p72
    %p74 = pneg %p73
    %p75 = scmp.eq.f32.partialorder %s61, 0.0
    %p76 = pnand %p74, %p75
    %p77 = pneg %p76
    %s78 = scalar_select %p77, 0.0, 1.0
    %v79 = vstv %s60
    %v80 = vmin.f32 %v43, %v79
    %v81 = vstv %s58
    %v82 = vmax.f32 %v39, %v81
    %v83 = vsub.f32 %v80, %v82
    %v84 = vadd.f32 %v83, 1.0
    %v85 = vmax.f32 %v84, 0.0
    %v86 = vstv %s61
    %v87 = vmin.f32 %v45, %v86
    %v88 = vstv %s59
    %v89 = vmax.f32 %v41, %v88
    %v90 = vsub.f32 %v87, %v89
    %v91 = vadd.f32 %v90, 1.0
    %v92 = vmax.f32 %v91, 0.0
    %v93 = vmul.f32 %v85, %v92
    %v94 = vstv %s67
    %v95 = vadd.f32 %v50, %v94
    %v96 = vsub.f32 %v95, %v93
    %v97 = vmax.f32 %v96, 1e-08
    %v98 = vrcp.pop %v97
    %v99 = vmul.f32 %v93, %v98
    %v100 = vstv %s78
    %v101 = vmul.f32 %v99, %v100
    %vm102 = vcmp.gt.f32.partialorder %v101, -inf
    %v103 = vsel %vm102, %v101, -inf
    %v104 = vstv %s62
    %v105 = vsel %vm102, %v104, 0.0
    %v106 = vsel %vm102, %v81, 0.0
    %v107 = vsel %vm102, %v88, 0.0
    %v108 = vsel %vm102, %v79, 0.0
    %v109 = vsel %vm102, %v86, 0.0
    %s110 = sld [smem:[#allocation6 + $0x1]]
    %s111 = sld [smem:[#allocation6 + $0x9]]
    %s112 = sld [smem:[#allocation6 + $0x11]]
    %s113 = sld [smem:[#allocation6 + $0x19]]
    %s114 = sld [smem:[#allocation6 + $0x21]]
    %s115 = ssub.f32 %s112, %s110
    %s116 = sadd.f32 %s115, 1.0
    %s117 = ssub.f32 %s113, %s111
    %s118 = sadd.f32 %s117, 1.0
    %s119 = smul.f32 %s116, %s118
    %p120 = scmp.eq.f32.partialorder %s110, 0.0
    %p121 = scmp.eq.f32.partialorder %s111, 0.0
    %p122 = pnand %p120, %p121
    %p123 = pneg %p122
    %p124 = scmp.eq.f32.partialorder %s112, 0.0
    %p125 = pnand %p123, %p124
    %p126 = pneg %p125
    %p127 = scmp.eq.f32.partialorder %s113, 0.0
    %p128 = pnand %p126, %p127
    %p129 = pneg %p128
    %s130 = scalar_select %p129, 0.0, 1.0
    %v131 = vstv %s112
    %v132 = vmin.f32 %v43, %v131
    %v133 = vstv %s110
    %v134 = vmax.f32 %v39, %v133
    %v135 = vsub.f32 %v132, %v134
    %v136 = vadd.f32 %v135, 1.0
    %v137 = vmax.f32 %v136, 0.0
    %v138 = vstv %s113
    %v139 = vmin.f32 %v45, %v138
    %v140 = vstv %s111
    %v141 = vmax.f32 %v41, %v140
    %v142 = vsub.f32 %v139, %v141
    %v143 = vadd.f32 %v142, 1.0
    %v144 = vmax.f32 %v143, 0.0
    %v145 = vmul.f32 %v137, %v144
    %v146 = vstv %s119
    %v147 = vadd.f32 %v50, %v146
    %v148 = vsub.f32 %v147, %v145
    %v149 = vmax.f32 %v148, 1e-08
    %v150 = vrcp.pop %v149
    %v151 = vmul.f32 %v145, %v150
    %v152 = vstv %s130
    %v153 = vmul.f32 %v151, %v152
    %vm154 = vcmp.gt.f32.partialorder %v153, %v103
    %v155 = vsel %vm154, %v153, %v103
    %v156 = vsel %vm154, 1.0, 0.0
    %v157 = vstv %s114
    %v158 = vsel %vm154, %v157, %v105
    %v159 = vsel %vm154, %v133, %v106
    %v160 = vsel %vm154, %v140, %v107
    %v161 = vsel %vm154, %v131, %v108
    %v162 = vsel %vm154, %v138, %v109
    %s163 = sld [smem:[#allocation6 + $0x2]]
    %s164 = sld [smem:[#allocation6 + $0xa]]
    %s165 = sld [smem:[#allocation6 + $0x12]]
    %s166 = sld [smem:[#allocation6 + $0x1a]]
    %s167 = sld [smem:[#allocation6 + $0x22]]
    %s168 = ssub.f32 %s165, %s163
    %s169 = sadd.f32 %s168, 1.0
    %s170 = ssub.f32 %s166, %s164
    %s171 = sadd.f32 %s170, 1.0
    %s172 = smul.f32 %s169, %s171
    %p173 = scmp.eq.f32.partialorder %s163, 0.0
    %p174 = scmp.eq.f32.partialorder %s164, 0.0
    %p175 = pnand %p173, %p174
    %p176 = pneg %p175
    %p177 = scmp.eq.f32.partialorder %s165, 0.0
    %p178 = pnand %p176, %p177
    %p179 = pneg %p178
    %p180 = scmp.eq.f32.partialorder %s166, 0.0
    %p181 = pnand %p179, %p180
    %p182 = pneg %p181
    %s183 = scalar_select %p182, 0.0, 1.0
    %v184 = vstv %s165
    %v185 = vmin.f32 %v43, %v184
    %v186 = vstv %s163
    %v187 = vmax.f32 %v39, %v186
    %v188 = vsub.f32 %v185, %v187
    %v189 = vadd.f32 %v188, 1.0
    %v190 = vmax.f32 %v189, 0.0
    %v191 = vstv %s166
    %v192 = vmin.f32 %v45, %v191
    %v193 = vstv %s164
    %v194 = vmax.f32 %v41, %v193
    %v195 = vsub.f32 %v192, %v194
    %v196 = vadd.f32 %v195, 1.0
    %v197 = vmax.f32 %v196, 0.0
    %v198 = vmul.f32 %v190, %v197
    %v199 = vstv %s172
    %v200 = vadd.f32 %v50, %v199
    %v201 = vsub.f32 %v200, %v198
    %v202 = vmax.f32 %v201, 1e-08
    %v203 = vrcp.pop %v202
    %v204 = vmul.f32 %v198, %v203
    %v205 = vstv %s183
    %v206 = vmul.f32 %v204, %v205
    %vm207 = vcmp.gt.f32.partialorder %v206, %v155
    %v208 = vsel %vm207, %v206, %v155
    %v209 = vsel %vm207, 2.0, %v156
    %v210 = vstv %s167
    %v211 = vsel %vm207, %v210, %v158
    %v212 = vsel %vm207, %v186, %v159
    %v213 = vsel %vm207, %v193, %v160
    %v214 = vsel %vm207, %v184, %v161
    %v215 = vsel %vm207, %v191, %v162
    %s216 = sld [smem:[#allocation6 + $0x3]]
    %s217 = sld [smem:[#allocation6 + $0xb]]
    %s218 = sld [smem:[#allocation6 + $0x13]]
    %s219 = sld [smem:[#allocation6 + $0x1b]]
    %s220 = sld [smem:[#allocation6 + $0x23]]
    %s221 = ssub.f32 %s218, %s216
    %s222 = sadd.f32 %s221, 1.0
    %s223 = ssub.f32 %s219, %s217
    %s224 = sadd.f32 %s223, 1.0
    %s225 = smul.f32 %s222, %s224
    %p226 = scmp.eq.f32.partialorder %s216, 0.0
    %p227 = scmp.eq.f32.partialorder %s217, 0.0
    %p228 = pnand %p226, %p227
    %p229 = pneg %p228
    %p230 = scmp.eq.f32.partialorder %s218, 0.0
    %p231 = pnand %p229, %p230
    %p232 = pneg %p231
    %p233 = scmp.eq.f32.partialorder %s219, 0.0
    %p234 = pnand %p232, %p233
    %p235 = pneg %p234
    %s236 = scalar_select %p235, 0.0, 1.0
    %v237 = vstv %s218
    %v238 = vmin.f32 %v43, %v237
    %v239 = vstv %s216
    %v240 = vmax.f32 %v39, %v239
    %v241 = vsub.f32 %v238, %v240
    %v242 = vadd.f32 %v241, 1.0
    %v243 = vmax.f32 %v242, 0.0
    %v244 = vstv %s219
    %v245 = vmin.f32 %v45, %v244
    %v246 = vstv %s217
    %v247 = vmax.f32 %v41, %v246
    %v248 = vsub.f32 %v245, %v247
    %v249 = vadd.f32 %v248, 1.0
    %v250 = vmax.f32 %v249, 0.0
    %v251 = vmul.f32 %v243, %v250
    %v252 = vstv %s225
    %v253 = vadd.f32 %v50, %v252
    %v254 = vsub.f32 %v253, %v251
    %v255 = vmax.f32 %v254, 1e-08
    %v256 = vrcp.pop %v255
    %v257 = vmul.f32 %v251, %v256
    %v258 = vstv %s236
    %v259 = vmul.f32 %v257, %v258
    %vm260 = vcmp.gt.f32.partialorder %v259, %v208
    %v261 = vsel %vm260, %v259, %v208
    %v262 = vsel %vm260, 3.0, %v209
    %v263 = vstv %s220
    %v264 = vsel %vm260, %v263, %v211
    %v265 = vsel %vm260, %v239, %v212
    %v266 = vsel %vm260, %v246, %v213
    %v267 = vsel %vm260, %v237, %v214
    %v268 = vsel %vm260, %v244, %v215
    %s269 = sld [smem:[#allocation6 + $0x4]]
    %s270 = sld [smem:[#allocation6 + $0xc]]
    %s271 = sld [smem:[#allocation6 + $0x14]]
    %s272 = sld [smem:[#allocation6 + $0x1c]]
    %s273 = sld [smem:[#allocation6 + $0x24]]
    %s274 = ssub.f32 %s271, %s269
    %s275 = sadd.f32 %s274, 1.0
    %s276 = ssub.f32 %s272, %s270
    %s277 = sadd.f32 %s276, 1.0
    %s278 = smul.f32 %s275, %s277
    %p279 = scmp.eq.f32.partialorder %s269, 0.0
    %p280 = scmp.eq.f32.partialorder %s270, 0.0
    %p281 = pnand %p279, %p280
    %p282 = pneg %p281
    %p283 = scmp.eq.f32.partialorder %s271, 0.0
    %p284 = pnand %p282, %p283
    %p285 = pneg %p284
    %p286 = scmp.eq.f32.partialorder %s272, 0.0
    %p287 = pnand %p285, %p286
    %p288 = pneg %p287
    %s289 = scalar_select %p288, 0.0, 1.0
    %v290 = vstv %s271
    %v291 = vmin.f32 %v43, %v290
    %v292 = vstv %s269
    %v293 = vmax.f32 %v39, %v292
    %v294 = vsub.f32 %v291, %v293
    %v295 = vadd.f32 %v294, 1.0
    %v296 = vmax.f32 %v295, 0.0
    %v297 = vstv %s272
    %v298 = vmin.f32 %v45, %v297
    %v299 = vstv %s270
    %v300 = vmax.f32 %v41, %v299
    %v301 = vsub.f32 %v298, %v300
    %v302 = vadd.f32 %v301, 1.0
    %v303 = vmax.f32 %v302, 0.0
    %v304 = vmul.f32 %v296, %v303
    %v305 = vstv %s278
    %v306 = vadd.f32 %v50, %v305
    %v307 = vsub.f32 %v306, %v304
    %v308 = vmax.f32 %v307, 1e-08
    %v309 = vrcp.pop %v308
    %v310 = vmul.f32 %v304, %v309
    %v311 = vstv %s289
    %v312 = vmul.f32 %v310, %v311
    %vm313 = vcmp.gt.f32.partialorder %v312, %v261
    %v314 = vsel %vm313, %v312, %v261
    %v315 = vsel %vm313, 4.0, %v262
    %v316 = vstv %s273
    %v317 = vsel %vm313, %v316, %v264
    %v318 = vsel %vm313, %v292, %v265
    %v319 = vsel %vm313, %v299, %v266
    %v320 = vsel %vm313, %v290, %v267
    %v321 = vsel %vm313, %v297, %v268
    %s322 = sld [smem:[#allocation6 + $0x5]]
    %s323 = sld [smem:[#allocation6 + $0xd]]
    %s324 = sld [smem:[#allocation6 + $0x15]]
    %s325 = sld [smem:[#allocation6 + $0x1d]]
    %s326 = sld [smem:[#allocation6 + $0x25]]
    %s327 = ssub.f32 %s324, %s322
    %s328 = sadd.f32 %s327, 1.0
    %s329 = ssub.f32 %s325, %s323
    %s330 = sadd.f32 %s329, 1.0
    %s331 = smul.f32 %s328, %s330
    %p332 = scmp.eq.f32.partialorder %s322, 0.0
    %p333 = scmp.eq.f32.partialorder %s323, 0.0
    %p334 = pnand %p332, %p333
    %p335 = pneg %p334
    %p336 = scmp.eq.f32.partialorder %s324, 0.0
    %p337 = pnand %p335, %p336
    %p338 = pneg %p337
    %p339 = scmp.eq.f32.partialorder %s325, 0.0
    %p340 = pnand %p338, %p339
    %p341 = pneg %p340
    %s342 = scalar_select %p341, 0.0, 1.0
    %v343 = vstv %s324
    %v344 = vmin.f32 %v43, %v343
    %v345 = vstv %s322
    %v346 = vmax.f32 %v39, %v345
    %v347 = vsub.f32 %v344, %v346
    %v348 = vadd.f32 %v347, 1.0
    %v349 = vmax.f32 %v348, 0.0
    %v350 = vstv %s325
    %v351 = vmin.f32 %v45, %v350
    %v352 = vstv %s323
    %v353 = vmax.f32 %v41, %v352
    %v354 = vsub.f32 %v351, %v353
    %v355 = vadd.f32 %v354, 1.0
    %v356 = vmax.f32 %v355, 0.0
    %v357 = vmul.f32 %v349, %v356
    %v358 = vstv %s331
    %v359 = vadd.f32 %v50, %v358
    %v360 = vsub.f32 %v359, %v357
    %v361 = vmax.f32 %v360, 1e-08
    %v362 = vrcp.pop %v361
    %v363 = vmul.f32 %v357, %v362
    %v364 = vstv %s342
    %v365 = vmul.f32 %v363, %v364
    %vm366 = vcmp.gt.f32.partialorder %v365, %v314
    %v367 = vsel %vm366, %v365, %v314
    %v368 = vsel %vm366, 5.0, %v315
    %v369 = vstv %s326
    %v370 = vsel %vm366, %v369, %v317
    %v371 = vsel %vm366, %v345, %v318
    %v372 = vsel %vm366, %v352, %v319
    %v373 = vsel %vm366, %v343, %v320
    %v374 = vsel %vm366, %v350, %v321
    %s375 = sld [smem:[#allocation6 + $0x6]]
    %s376 = sld [smem:[#allocation6 + $0xe]]
    %s377 = sld [smem:[#allocation6 + $0x16]]
    %s378 = sld [smem:[#allocation6 + $0x1e]]
    %s379 = sld [smem:[#allocation6 + $0x26]]
    %s380 = ssub.f32 %s377, %s375
    %s381 = sadd.f32 %s380, 1.0
    %s382 = ssub.f32 %s378, %s376
    %s383 = sadd.f32 %s382, 1.0
    %s384 = smul.f32 %s381, %s383
    %p385 = scmp.eq.f32.partialorder %s375, 0.0
    %p386 = scmp.eq.f32.partialorder %s376, 0.0
    %p387 = pnand %p385, %p386
    %p388 = pneg %p387
    %p389 = scmp.eq.f32.partialorder %s377, 0.0
    %p390 = pnand %p388, %p389
    %p391 = pneg %p390
    %p392 = scmp.eq.f32.partialorder %s378, 0.0
    %p393 = pnand %p391, %p392
    %p394 = pneg %p393
    %s395 = scalar_select %p394, 0.0, 1.0
    %v396 = vstv %s377
    %v397 = vmin.f32 %v43, %v396
    %v398 = vstv %s375
    %v399 = vmax.f32 %v39, %v398
    %v400 = vsub.f32 %v397, %v399
    %v401 = vadd.f32 %v400, 1.0
    %v402 = vmax.f32 %v401, 0.0
    %v403 = vstv %s378
    %v404 = vmin.f32 %v45, %v403
    %v405 = vstv %s376
    %v406 = vmax.f32 %v41, %v405
    %v407 = vsub.f32 %v404, %v406
    %v408 = vadd.f32 %v407, 1.0
    %v409 = vmax.f32 %v408, 0.0
    %v410 = vmul.f32 %v402, %v409
    %v411 = vstv %s384
    %v412 = vadd.f32 %v50, %v411
    %v413 = vsub.f32 %v412, %v410
    %v414 = vmax.f32 %v413, 1e-08
    %v415 = vrcp.pop %v414
    %v416 = vmul.f32 %v410, %v415
    %v417 = vstv %s395
    %v418 = vmul.f32 %v416, %v417
    %vm419 = vcmp.gt.f32.partialorder %v418, %v367
    %v420 = vsel %vm419, %v418, %v367
    %v421 = vsel %vm419, 6.0, %v368
    %v422 = vstv %s379
    %v423 = vsel %vm419, %v422, %v370
    %v424 = vsel %vm419, %v398, %v371
    %v425 = vsel %vm419, %v405, %v372
    %v426 = vsel %vm419, %v396, %v373
    %v427 = vsel %vm419, %v403, %v374
    %s428 = sld [smem:[#allocation6 + $0x7]]
    %s429 = sld [smem:[#allocation6 + $0xf]]
    %s430 = sld [smem:[#allocation6 + $0x17]]
    %s431 = sld [smem:[#allocation6 + $0x1f]]
    %s432 = sld [smem:[#allocation6 + $0x27]]
    %s433 = ssub.f32 %s430, %s428
    %s434 = sadd.f32 %s433, 1.0
    %s435 = ssub.f32 %s431, %s429
    %s436 = sadd.f32 %s435, 1.0
    %s437 = smul.f32 %s434, %s436
    %p438 = scmp.eq.f32.partialorder %s428, 0.0
    %p439 = scmp.eq.f32.partialorder %s429, 0.0
    %p440 = pnand %p438, %p439
    %p441 = pneg %p440
    %p442 = scmp.eq.f32.partialorder %s430, 0.0
    %p443 = pnand %p441, %p442
    %p444 = pneg %p443
    %p445 = scmp.eq.f32.partialorder %s431, 0.0
    %p446 = pnand %p444, %p445
    %p447 = pneg %p446
    %s448 = scalar_select %p447, 0.0, 1.0
    %v449 = vstv %s430
    %v450 = vmin.f32 %v43, %v449
    %v451 = vstv %s428
    %v452 = vmax.f32 %v39, %v451
    %v453 = vsub.f32 %v450, %v452
    %v454 = vadd.f32 %v453, 1.0
    %v455 = vmax.f32 %v454, 0.0
    %v456 = vstv %s431
    %v457 = vmin.f32 %v45, %v456
    %v458 = vstv %s429
    %v459 = vmax.f32 %v41, %v458
    %v460 = vsub.f32 %v457, %v459
    %v461 = vadd.f32 %v460, 1.0
    %v462 = vmax.f32 %v461, 0.0
    %v463 = vmul.f32 %v455, %v462
    %v464 = vstv %s437
    %v465 = vadd.f32 %v50, %v464
    %v466 = vsub.f32 %v465, %v463
    %v467 = vmax.f32 %v466, 1e-08
    %v468 = vrcp.pop %v467
    %v469 = vmul.f32 %v463, %v468
    %v470 = vstv %s448
    %v471 = vmul.f32 %v469, %v470
    %vm472 = vcmp.gt.f32.partialorder %v471, %v420
    %v473 = vsel %vm472, %v471, %v420
    %v474 = vsel %vm472, 7.0, %v421
    %v475 = vstv %s432
    %v476 = vsel %vm472, %v475, %v423
    %v477 = vsel %vm472, %v451, %v424
    %v478 = vsel %vm472, %v458, %v425
    %v479 = vsel %vm472, %v449, %v426
    %v480 = vsel %vm472, %v456, %v427
    %v481 = vsel %vm57, -1.0, %v473
    %v482 = vmax.f32 %v47, 1e-06
    %v483 = vmax.f32 %v49, 1e-06
    %v484 = vmul.f32 %v47, 0.5
    %v485 = vadd.f32 %v39, %v484
    %v486 = vmul.f32 %v49, 0.5
    %v487 = vadd.f32 %v41, %v486
    %v488 = vsub.f32 %v479, %v477
    %v489 = vadd.f32 %v488, 1.0
    %v490 = vsub.f32 %v480, %v478
    %v491 = vadd.f32 %v490, 1.0
    %v492 = vmul.f32 %v489, 0.5
    %v493 = vadd.f32 %v477, %v492
    %v494 = vmul.f32 %v491, 0.5
    %v495 = vadd.f32 %v478, %v494
    %v496 = vmax.f32 %v489, 1e-06
    %v497 = vmax.f32 %v491, 1e-06
    %v498 = vsub.f32 %v493, %v485
    %v499 = vrcp.pop %v482
    %v500 = vmul.f32 %v498, %v499
    %v501 = vsub.f32 %v495, %v487
    %v502 = vrcp.pop %v483
    %v503 = vmul.f32 %v501, %v502
    %v504 = vmul.f32 %v496, %v499
    %v505 = vlog2.pop %v504
    %v506 = vmul.f32 %v505, 0.6931472
    %v507 = vmul.f32 %v497, %v502
    %v508 = vlog2.pop %v507
    %v509 = vmul.f32 %v508, 0.6931472
    %510 = vst [vmem:[#allocation7] sm:$0xff] %v481
    %s511 = scalar_lea.vmem [#allocation7], 8
    %512 = vst [vmem:[%s511] sm:$0xff] %v474
    %s513 = scalar_lea.vmem [#allocation7], 16
    %514 = vst [vmem:[%s513] sm:$0xff] %v476
    %v515 = vmul.f32 %v500, 10.0
    %s516 = scalar_lea.vmem [#allocation7], 24
    %517 = vst [vmem:[%s516] sm:$0xff] %v515
    %v518 = vmul.f32 %v503, 10.0
    %s519 = scalar_lea.vmem [#allocation7], 32
    %520 = vst [vmem:[%s519] sm:$0xff] %v518
    %v521 = vmul.f32 %v506, 5.0
    %s522 = scalar_lea.vmem [#allocation7], 40
    %523 = vst [vmem:[%s522] sm:$0xff] %v521
    %v524 = vmul.f32 %v509, 5.0
    %s525 = scalar_lea.vmem [#allocation7], 48
    %526 = vst [vmem:[%s525] sm:$0xff] %v524
    %s527 = scalar_lea.vmem [#allocation2], 32
    %v528 = vld [vmem:[%s527] sm:$0xff]
    %s529 = scalar_lea.vmem [#allocation2], 40
    %v530 = vld [vmem:[%s529] sm:$0xff]
    %s531 = scalar_lea.vmem [#allocation2], 48
    %v532 = vld [vmem:[%s531] sm:$0xff]
    %s533 = scalar_lea.vmem [#allocation2], 56
    %v534 = vld [vmem:[%s533] sm:$0xff]
    %v535 = vsub.f32 %v532, %v528
    %v536 = vadd.f32 %v535, 1.0
    %v537 = vsub.f32 %v534, %v530
    %v538 = vadd.f32 %v537, 1.0
    %v539 = vmul.f32 %v536, %v538
    %vm540 = vcmp.eq.f32.partialorder %v528, 0.0
    %vm541 = vcmp.eq.f32.partialorder %v530, 0.0
    %vm542 = vmand %vm540, %vm541
    %vm543 = vcmp.eq.f32.partialorder %v532, 0.0
    %vm544 = vmand %vm542, %vm543
    %vm545 = vcmp.eq.f32.partialorder %v534, 0.0
    %vm546 = vmand %vm544, %vm545
    %s547 = sld [smem:[#allocation6 + $0x28]]
    %s548 = sld [smem:[#allocation6 + $0x30]]
    %s549 = sld [smem:[#allocation6 + $0x38]]
    %s550 = sld [smem:[#allocation6 + $0x40]]
    %s551 = sld [smem:[#allocation6 + $0x48]]
    %s552 = ssub.f32 %s549, %s547
    %s553 = sadd.f32 %s552, 1.0
    %s554 = ssub.f32 %s550, %s548
    %s555 = sadd.f32 %s554, 1.0
    %s556 = smul.f32 %s553, %s555
    %p557 = scmp.eq.f32.partialorder %s547, 0.0
    %p558 = scmp.eq.f32.partialorder %s548, 0.0
    %p559 = pnand %p557, %p558
    %p560 = pneg %p559
    %p561 = scmp.eq.f32.partialorder %s549, 0.0
    %p562 = pnand %p560, %p561
    %p563 = pneg %p562
    %p564 = scmp.eq.f32.partialorder %s550, 0.0
    %p565 = pnand %p563, %p564
    %p566 = pneg %p565
    %s567 = scalar_select %p566, 0.0, 1.0
    %v568 = vstv %s549
    %v569 = vmin.f32 %v532, %v568
    %v570 = vstv %s547
    %v571 = vmax.f32 %v528, %v570
    %v572 = vsub.f32 %v569, %v571
    %v573 = vadd.f32 %v572, 1.0
    %v574 = vmax.f32 %v573, 0.0
    %v575 = vstv %s550
    %v576 = vmin.f32 %v534, %v575
    %v577 = vstv %s548
    %v578 = vmax.f32 %v530, %v577
    %v579 = vsub.f32 %v576, %v578
    %v580 = vadd.f32 %v579, 1.0
    %v581 = vmax.f32 %v580, 0.0
    %v582 = vmul.f32 %v574, %v581
    %v583 = vstv %s556
    %v584 = vadd.f32 %v539, %v583
    %v585 = vsub.f32 %v584, %v582
    %v586 = vmax.f32 %v585, 1e-08
    %v587 = vrcp.pop %v586
    %v588 = vmul.f32 %v582, %v587
    %v589 = vstv %s567
    %v590 = vmul.f32 %v588, %v589
    %vm591 = vcmp.gt.f32.partialorder %v590, -inf
    %v592 = vsel %vm591, %v590, -inf
    %v593 = vstv %s551
    %v594 = vsel %vm591, %v593, 0.0
    %v595 = vsel %vm591, %v570, 0.0
    %v596 = vsel %vm591, %v577, 0.0
    %v597 = vsel %vm591, %v568, 0.0
    %v598 = vsel %vm591, %v575, 0.0
    %s599 = sld [smem:[#allocation6 + $0x29]]
    %s600 = sld [smem:[#allocation6 + $0x31]]
    %s601 = sld [smem:[#allocation6 + $0x39]]
    %s602 = sld [smem:[#allocation6 + $0x41]]
    %s603 = sld [smem:[#allocation6 + $0x49]]
    %s604 = ssub.f32 %s601, %s599
    %s605 = sadd.f32 %s604, 1.0
    %s606 = ssub.f32 %s602, %s600
    %s607 = sadd.f32 %s606, 1.0
    %s608 = smul.f32 %s605, %s607
    %p609 = scmp.eq.f32.partialorder %s599, 0.0
    %p610 = scmp.eq.f32.partialorder %s600, 0.0
    %p611 = pnand %p609, %p610
    %p612 = pneg %p611
    %p613 = scmp.eq.f32.partialorder %s601, 0.0
    %p614 = pnand %p612, %p613
    %p615 = pneg %p614
    %p616 = scmp.eq.f32.partialorder %s602, 0.0
    %p617 = pnand %p615, %p616
    %p618 = pneg %p617
    %s619 = scalar_select %p618, 0.0, 1.0
    %v620 = vstv %s601
    %v621 = vmin.f32 %v532, %v620
    %v622 = vstv %s599
    %v623 = vmax.f32 %v528, %v622
    %v624 = vsub.f32 %v621, %v623
    %v625 = vadd.f32 %v624, 1.0
    %v626 = vmax.f32 %v625, 0.0
    %v627 = vstv %s602
    %v628 = vmin.f32 %v534, %v627
    %v629 = vstv %s600
    %v630 = vmax.f32 %v530, %v629
    %v631 = vsub.f32 %v628, %v630
    %v632 = vadd.f32 %v631, 1.0
    %v633 = vmax.f32 %v632, 0.0
    %v634 = vmul.f32 %v626, %v633
    %v635 = vstv %s608
    %v636 = vadd.f32 %v539, %v635
    %v637 = vsub.f32 %v636, %v634
    %v638 = vmax.f32 %v637, 1e-08
    %v639 = vrcp.pop %v638
    %v640 = vmul.f32 %v634, %v639
    %v641 = vstv %s619
    %v642 = vmul.f32 %v640, %v641
    %vm643 = vcmp.gt.f32.partialorder %v642, %v592
    %v644 = vsel %vm643, %v642, %v592
    %v645 = vsel %vm643, 1.0, 0.0
    %v646 = vstv %s603
    %v647 = vsel %vm643, %v646, %v594
    %v648 = vsel %vm643, %v622, %v595
    %v649 = vsel %vm643, %v629, %v596
    %v650 = vsel %vm643, %v620, %v597
    %v651 = vsel %vm643, %v627, %v598
    %s652 = sld [smem:[#allocation6 + $0x2a]]
    %s653 = sld [smem:[#allocation6 + $0x32]]
    %s654 = sld [smem:[#allocation6 + $0x3a]]
    %s655 = sld [smem:[#allocation6 + $0x42]]
    %s656 = sld [smem:[#allocation6 + $0x4a]]
    %s657 = ssub.f32 %s654, %s652
    %s658 = sadd.f32 %s657, 1.0
    %s659 = ssub.f32 %s655, %s653
    %s660 = sadd.f32 %s659, 1.0
    %s661 = smul.f32 %s658, %s660
    %p662 = scmp.eq.f32.partialorder %s652, 0.0
    %p663 = scmp.eq.f32.partialorder %s653, 0.0
    %p664 = pnand %p662, %p663
    %p665 = pneg %p664
    %p666 = scmp.eq.f32.partialorder %s654, 0.0
    %p667 = pnand %p665, %p666
    %p668 = pneg %p667
    %p669 = scmp.eq.f32.partialorder %s655, 0.0
    %p670 = pnand %p668, %p669
    %p671 = pneg %p670
    %s672 = scalar_select %p671, 0.0, 1.0
    %v673 = vstv %s654
    %v674 = vmin.f32 %v532, %v673
    %v675 = vstv %s652
    %v676 = vmax.f32 %v528, %v675
    %v677 = vsub.f32 %v674, %v676
    %v678 = vadd.f32 %v677, 1.0
    %v679 = vmax.f32 %v678, 0.0
    %v680 = vstv %s655
    %v681 = vmin.f32 %v534, %v680
    %v682 = vstv %s653
    %v683 = vmax.f32 %v530, %v682
    %v684 = vsub.f32 %v681, %v683
    %v685 = vadd.f32 %v684, 1.0
    %v686 = vmax.f32 %v685, 0.0
    %v687 = vmul.f32 %v679, %v686
    %v688 = vstv %s661
    %v689 = vadd.f32 %v539, %v688
    %v690 = vsub.f32 %v689, %v687
    %v691 = vmax.f32 %v690, 1e-08
    %v692 = vrcp.pop %v691
    %v693 = vmul.f32 %v687, %v692
    %v694 = vstv %s672
    %v695 = vmul.f32 %v693, %v694
    %vm696 = vcmp.gt.f32.partialorder %v695, %v644
    %v697 = vsel %vm696, %v695, %v644
    %v698 = vsel %vm696, 2.0, %v645
    %v699 = vstv %s656
    %v700 = vsel %vm696, %v699, %v647
    %v701 = vsel %vm696, %v675, %v648
    %v702 = vsel %vm696, %v682, %v649
    %v703 = vsel %vm696, %v673, %v650
    %v704 = vsel %vm696, %v680, %v651
    %s705 = sld [smem:[#allocation6 + $0x2b]]
    %s706 = sld [smem:[#allocation6 + $0x33]]
    %s707 = sld [smem:[#allocation6 + $0x3b]]
    %s708 = sld [smem:[#allocation6 + $0x43]]
    %s709 = sld [smem:[#allocation6 + $0x4b]]
    %s710 = ssub.f32 %s707, %s705
    %s711 = sadd.f32 %s710, 1.0
    %s712 = ssub.f32 %s708, %s706
    %s713 = sadd.f32 %s712, 1.0
    %s714 = smul.f32 %s711, %s713
    %p715 = scmp.eq.f32.partialorder %s705, 0.0
    %p716 = scmp.eq.f32.partialorder %s706, 0.0
    %p717 = pnand %p715, %p716
    %p718 = pneg %p717
    %p719 = scmp.eq.f32.partialorder %s707, 0.0
    %p720 = pnand %p718, %p719
    %p721 = pneg %p720
    %p722 = scmp.eq.f32.partialorder %s708, 0.0
    %p723 = pnand %p721, %p722
    %p724 = pneg %p723
    %s725 = scalar_select %p724, 0.0, 1.0
    %v726 = vstv %s707
    %v727 = vmin.f32 %v532, %v726
    %v728 = vstv %s705
    %v729 = vmax.f32 %v528, %v728
    %v730 = vsub.f32 %v727, %v729
    %v731 = vadd.f32 %v730, 1.0
    %v732 = vmax.f32 %v731, 0.0
    %v733 = vstv %s708
    %v734 = vmin.f32 %v534, %v733
    %v735 = vstv %s706
    %v736 = vmax.f32 %v530, %v735
    %v737 = vsub.f32 %v734, %v736
    %v738 = vadd.f32 %v737, 1.0
    %v739 = vmax.f32 %v738, 0.0
    %v740 = vmul.f32 %v732, %v739
    %v741 = vstv %s714
    %v742 = vadd.f32 %v539, %v741
    %v743 = vsub.f32 %v742, %v740
    %v744 = vmax.f32 %v743, 1e-08
    %v745 = vrcp.pop %v744
    %v746 = vmul.f32 %v740, %v745
    %v747 = vstv %s725
    %v748 = vmul.f32 %v746, %v747
    %vm749 = vcmp.gt.f32.partialorder %v748, %v697
    %v750 = vsel %vm749, %v748, %v697
    %v751 = vsel %vm749, 3.0, %v698
    %v752 = vstv %s709
    %v753 = vsel %vm749, %v752, %v700
    %v754 = vsel %vm749, %v728, %v701
    %v755 = vsel %vm749, %v735, %v702
    %v756 = vsel %vm749, %v726, %v703
    %v757 = vsel %vm749, %v733, %v704
    %s758 = sld [smem:[#allocation6 + $0x2c]]
    %s759 = sld [smem:[#allocation6 + $0x34]]
    %s760 = sld [smem:[#allocation6 + $0x3c]]
    %s761 = sld [smem:[#allocation6 + $0x44]]
    %s762 = sld [smem:[#allocation6 + $0x4c]]
    %s763 = ssub.f32 %s760, %s758
    %s764 = sadd.f32 %s763, 1.0
    %s765 = ssub.f32 %s761, %s759
    %s766 = sadd.f32 %s765, 1.0
    %s767 = smul.f32 %s764, %s766
    %p768 = scmp.eq.f32.partialorder %s758, 0.0
    %p769 = scmp.eq.f32.partialorder %s759, 0.0
    %p770 = pnand %p768, %p769
    %p771 = pneg %p770
    %p772 = scmp.eq.f32.partialorder %s760, 0.0
    %p773 = pnand %p771, %p772
    %p774 = pneg %p773
    %p775 = scmp.eq.f32.partialorder %s761, 0.0
    %p776 = pnand %p774, %p775
    %p777 = pneg %p776
    %s778 = scalar_select %p777, 0.0, 1.0
    %v779 = vstv %s760
    %v780 = vmin.f32 %v532, %v779
    %v781 = vstv %s758
    %v782 = vmax.f32 %v528, %v781
    %v783 = vsub.f32 %v780, %v782
    %v784 = vadd.f32 %v783, 1.0
    %v785 = vmax.f32 %v784, 0.0
    %v786 = vstv %s761
    %v787 = vmin.f32 %v534, %v786
    %v788 = vstv %s759
    %v789 = vmax.f32 %v530, %v788
    %v790 = vsub.f32 %v787, %v789
    %v791 = vadd.f32 %v790, 1.0
    %v792 = vmax.f32 %v791, 0.0
    %v793 = vmul.f32 %v785, %v792
    %v794 = vstv %s767
    %v795 = vadd.f32 %v539, %v794
    %v796 = vsub.f32 %v795, %v793
    %v797 = vmax.f32 %v796, 1e-08
    %v798 = vrcp.pop %v797
    %v799 = vmul.f32 %v793, %v798
    %v800 = vstv %s778
    %v801 = vmul.f32 %v799, %v800
    %vm802 = vcmp.gt.f32.partialorder %v801, %v750
    %v803 = vsel %vm802, %v801, %v750
    %v804 = vsel %vm802, 4.0, %v751
    %v805 = vstv %s762
    %v806 = vsel %vm802, %v805, %v753
    %v807 = vsel %vm802, %v781, %v754
    %v808 = vsel %vm802, %v788, %v755
    %v809 = vsel %vm802, %v779, %v756
    %v810 = vsel %vm802, %v786, %v757
    %s811 = sld [smem:[#allocation6 + $0x2d]]
    %s812 = sld [smem:[#allocation6 + $0x35]]
    %s813 = sld [smem:[#allocation6 + $0x3d]]
    %s814 = sld [smem:[#allocation6 + $0x45]]
    %s815 = sld [smem:[#allocation6 + $0x4d]]
    %s816 = ssub.f32 %s813, %s811
    %s817 = sadd.f32 %s816, 1.0
    %s818 = ssub.f32 %s814, %s812
    %s819 = sadd.f32 %s818, 1.0
    %s820 = smul.f32 %s817, %s819
    %p821 = scmp.eq.f32.partialorder %s811, 0.0
    %p822 = scmp.eq.f32.partialorder %s812, 0.0
    %p823 = pnand %p821, %p822
    %p824 = pneg %p823
    %p825 = scmp.eq.f32.partialorder %s813, 0.0
    %p826 = pnand %p824, %p825
    %p827 = pneg %p826
    %p828 = scmp.eq.f32.partialorder %s814, 0.0
    %p829 = pnand %p827, %p828
    %p830 = pneg %p829
    %s831 = scalar_select %p830, 0.0, 1.0
    %v832 = vstv %s813
    %v833 = vmin.f32 %v532, %v832
    %v834 = vstv %s811
    %v835 = vmax.f32 %v528, %v834
    %v836 = vsub.f32 %v833, %v835
    %v837 = vadd.f32 %v836, 1.0
    %v838 = vmax.f32 %v837, 0.0
    %v839 = vstv %s814
    %v840 = vmin.f32 %v534, %v839
    %v841 = vstv %s812
    %v842 = vmax.f32 %v530, %v841
    %v843 = vsub.f32 %v840, %v842
    %v844 = vadd.f32 %v843, 1.0
    %v845 = vmax.f32 %v844, 0.0
    %v846 = vmul.f32 %v838, %v845
    %v847 = vstv %s820
    %v848 = vadd.f32 %v539, %v847
    %v849 = vsub.f32 %v848, %v846
    %v850 = vmax.f32 %v849, 1e-08
    %v851 = vrcp.pop %v850
    %v852 = vmul.f32 %v846, %v851
    %v853 = vstv %s831
    %v854 = vmul.f32 %v852, %v853
    %vm855 = vcmp.gt.f32.partialorder %v854, %v803
    %v856 = vsel %vm855, %v854, %v803
    %v857 = vsel %vm855, 5.0, %v804
    %v858 = vstv %s815
    %v859 = vsel %vm855, %v858, %v806
    %v860 = vsel %vm855, %v834, %v807
    %v861 = vsel %vm855, %v841, %v808
    %v862 = vsel %vm855, %v832, %v809
    %v863 = vsel %vm855, %v839, %v810
    %s864 = sld [smem:[#allocation6 + $0x2e]]
    %s865 = sld [smem:[#allocation6 + $0x36]]
    %s866 = sld [smem:[#allocation6 + $0x3e]]
    %s867 = sld [smem:[#allocation6 + $0x46]]
    %s868 = sld [smem:[#allocation6 + $0x4e]]
    %s869 = ssub.f32 %s866, %s864
    %s870 = sadd.f32 %s869, 1.0
    %s871 = ssub.f32 %s867, %s865
    %s872 = sadd.f32 %s871, 1.0
    %s873 = smul.f32 %s870, %s872
    %p874 = scmp.eq.f32.partialorder %s864, 0.0
    %p875 = scmp.eq.f32.partialorder %s865, 0.0
    %p876 = pnand %p874, %p875
    %p877 = pneg %p876
    %p878 = scmp.eq.f32.partialorder %s866, 0.0
    %p879 = pnand %p877, %p878
    %p880 = pneg %p879
    %p881 = scmp.eq.f32.partialorder %s867, 0.0
    %p882 = pnand %p880, %p881
    %p883 = pneg %p882
    %s884 = scalar_select %p883, 0.0, 1.0
    %v885 = vstv %s866
    %v886 = vmin.f32 %v532, %v885
    %v887 = vstv %s864
    %v888 = vmax.f32 %v528, %v887
    %v889 = vsub.f32 %v886, %v888
    %v890 = vadd.f32 %v889, 1.0
    %v891 = vmax.f32 %v890, 0.0
    %v892 = vstv %s867
    %v893 = vmin.f32 %v534, %v892
    %v894 = vstv %s865
    %v895 = vmax.f32 %v530, %v894
    %v896 = vsub.f32 %v893, %v895
    %v897 = vadd.f32 %v896, 1.0
    %v898 = vmax.f32 %v897, 0.0
    %v899 = vmul.f32 %v891, %v898
    %v900 = vstv %s873
    %v901 = vadd.f32 %v539, %v900
    %v902 = vsub.f32 %v901, %v899
    %v903 = vmax.f32 %v902, 1e-08
    %v904 = vrcp.pop %v903
    %v905 = vmul.f32 %v899, %v904
    %v906 = vstv %s884
    %v907 = vmul.f32 %v905, %v906
    %vm908 = vcmp.gt.f32.partialorder %v907, %v856
    %v909 = vsel %vm908, %v907, %v856
    %v910 = vsel %vm908, 6.0, %v857
    %v911 = vstv %s868
    %v912 = vsel %vm908, %v911, %v859
    %v913 = vsel %vm908, %v887, %v860
    %v914 = vsel %vm908, %v894, %v861
    %v915 = vsel %vm908, %v885, %v862
    %v916 = vsel %vm908, %v892, %v863
    %s917 = sld [smem:[#allocation6 + $0x2f]]
    %s918 = sld [smem:[#allocation6 + $0x37]]
    %s919 = sld [smem:[#allocation6 + $0x3f]]
    %s920 = sld [smem:[#allocation6 + $0x47]]
    %s921 = sld [smem:[#allocation6 + $0x4f]]
    %s922 = ssub.f32 %s919, %s917
    %s923 = sadd.f32 %s922, 1.0
    %s924 = ssub.f32 %s920, %s918
    %s925 = sadd.f32 %s924, 1.0
    %s926 = smul.f32 %s923, %s925
    %p927 = scmp.eq.f32.partialorder %s917, 0.0
    %p928 = scmp.eq.f32.partialorder %s918, 0.0
    %p929 = pnand %p927, %p928
    %p930 = pneg %p929
    %p931 = scmp.eq.f32.partialorder %s919, 0.0
    %p932 = pnand %p930, %p931
    %p933 = pneg %p932
    %p934 = scmp.eq.f32.partialorder %s920, 0.0
    %p935 = pnand %p933, %p934
    %p936 = pneg %p935
    %s937 = scalar_select %p936, 0.0, 1.0
    %v938 = vstv %s919
    %v939 = vmin.f32 %v532, %v938
    %v940 = vstv %s917
    %v941 = vmax.f32 %v528, %v940
    %v942 = vsub.f32 %v939, %v941
    %v943 = vadd.f32 %v942, 1.0
    %v944 = vmax.f32 %v943, 0.0
    %v945 = vstv %s920
    %v946 = vmin.f32 %v534, %v945
    %v947 = vstv %s918
    %v948 = vmax.f32 %v530, %v947
    %v949 = vsub.f32 %v946, %v948
    %v950 = vadd.f32 %v949, 1.0
    %v951 = vmax.f32 %v950, 0.0
    %v952 = vmul.f32 %v944, %v951
    %v953 = vstv %s926
    %v954 = vadd.f32 %v539, %v953
    %v955 = vsub.f32 %v954, %v952
    %v956 = vmax.f32 %v955, 1e-08
    %v957 = vrcp.pop %v956
    %v958 = vmul.f32 %v952, %v957
    %v959 = vstv %s937
    %v960 = vmul.f32 %v958, %v959
    %vm961 = vcmp.gt.f32.partialorder %v960, %v909
    %v962 = vsel %vm961, %v960, %v909
    %v963 = vsel %vm961, 7.0, %v910
    %v964 = vstv %s921
    %v965 = vsel %vm961, %v964, %v912
    %v966 = vsel %vm961, %v940, %v913
    %v967 = vsel %vm961, %v947, %v914
    %v968 = vsel %vm961, %v938, %v915
    %v969 = vsel %vm961, %v945, %v916
    %v970 = vsel %vm546, -1.0, %v962
    %v971 = vmax.f32 %v536, 1e-06
    %v972 = vmax.f32 %v538, 1e-06
    %v973 = vmul.f32 %v536, 0.5
    %v974 = vadd.f32 %v528, %v973
    %v975 = vmul.f32 %v538, 0.5
    %v976 = vadd.f32 %v530, %v975
    %v977 = vsub.f32 %v968, %v966
    %v978 = vadd.f32 %v977, 1.0
    %v979 = vsub.f32 %v969, %v967
    %v980 = vadd.f32 %v979, 1.0
    %v981 = vmul.f32 %v978, 0.5
    %v982 = vadd.f32 %v966, %v981
    %v983 = vmul.f32 %v980, 0.5
    %v984 = vadd.f32 %v967, %v983
    %v985 = vmax.f32 %v978, 1e-06
    %v986 = vmax.f32 %v980, 1e-06
    %v987 = vsub.f32 %v982, %v974
    %v988 = vrcp.pop %v971
    %v989 = vmul.f32 %v987, %v988
    %v990 = vsub.f32 %v984, %v976
    %v991 = vrcp.pop %v972
    %v992 = vmul.f32 %v990, %v991
    %v993 = vmul.f32 %v985, %v988
    %v994 = vlog2.pop %v993
    %v995 = vmul.f32 %v994, 0.6931472
    %v996 = vmul.f32 %v986, %v991
    %v997 = vlog2.pop %v996
    %v998 = vmul.f32 %v997, 0.6931472
    %s999 = scalar_lea.vmem [#allocation7], 56
    %1000 = vst [vmem:[%s999] sm:$0xff] %v970
    %s1001 = scalar_lea.vmem [#allocation7], 64
    %1002 = vst [vmem:[%s1001] sm:$0xff] %v963
    %s1003 = scalar_lea.vmem [#allocation7], 72
    %1004 = vst [vmem:[%s1003] sm:$0xff] %v965
    %v1005 = vmul.f32 %v989, 10.0
    %s1006 = scalar_lea.vmem [#allocation7], 80
    %1007 = vst [vmem:[%s1006] sm:$0xff] %v1005
    %v1008 = vmul.f32 %v992, 10.0
    %s1009 = scalar_lea.vmem [#allocation7], 88
    %1010 = vst [vmem:[%s1009] sm:$0xff] %v1008
    %v1011 = vmul.f32 %v995, 5.0
    %s1012 = scalar_lea.vmem [#allocation7], 96
    %1013 = vst [vmem:[%s1012] sm:$0xff] %v1011
    %v1014 = vmul.f32 %v998, 5.0
    %s1015 = scalar_lea.vmem [#allocation7], 104
    %1016 = vst [vmem:[%s1015] sm:$0xff] %v1014
    // Predicated region
    $region18: #{tpu_custom_call.1} parent=1 // pred_check
      _
    $region19: #{tpu_custom_call.1} parent=1 // pred_check_branch
      %1018 = sbr.rel (0) target = $region21
    $region20: #{tpu_custom_call.1} parent=1 // pred_region
      %s1020 = ssub.s32 1792, 1792
      %1021 = vsyncadd [#allocation4], %s1020
      %s1022 = sshll.u32 [#allocation7], 4
      %s1023 = int_to_ptr.vmem [resolvable:$true] %s1022
      %1028 = dma.vmem_to_hbm [thread:$0]  %s1023, 1792, %s2, [#allocation4], 128, 128, 8
    $region21: #{tpu_custom_call.1} parent=1 // pred_fallthru
      _
    // Predicated region
    $region22: #{tpu_custom_call.1} parent=1 // pred_check
      _
    $region23: #{tpu_custom_call.1} parent=1 // pred_check_branch
      %1030 = sbr.rel (0) target = $region25
    $region24: #{tpu_custom_call.1} parent=1 // pred_region
      %1031 = dma.done [#allocation4], 1792
    $region25: #{tpu_custom_call.1} parent=1 // pred_fallthru
      _
    %1032 = vsyncpa [#allocation3], 1
    %1033 = vsyncpa [#allocation4], 1
    %1034 = vsyncpa [#allocation5], 1

</llo_original>
